<compile_context>
chip_gen: v6e
topology: v6e:2x2x1
jax: 0.10.0
libtpu: 0.0.40
codegen_flags: <defaults>
</compile_context>

<pallas_src>
import jax
import jax.numpy as jnp
import numpy as np
from jax.experimental import pallas as pl
from jax.experimental.pallas import tpu as pltpu

EPS = 1e-5
LANES = 128


def _round_up(c, m=LANES):
    return ((c + m - 1) // m) * m


def _pad_axis(a, axis, size, value=0.0):
    pad = size - a.shape[axis]
    if pad == 0:
        return a
    widths = [(0, 0)] * a.ndim
    widths[axis] = (0, pad)
    return jnp.pad(a, widths, constant_values=value)


def _bn_train(y, gamma, beta):
    # y: (rows, C) fp32. Training-mode BatchNorm2d: per-channel stats over all
    # rows (= N*H*W), biased variance, two-pass centered variance for stability.
    mean = jnp.mean(y, axis=0, keepdims=True)
    yc = y - mean
    var = jnp.mean(yc * yc, axis=0, keepdims=True)
    return yc * (gamma * jax.lax.rsqrt(var + EPS)) + beta


def _make_kernel(N, H, W, Cip, Cmp, Cep, stride, downsample):
    Ho = (H - 1) // stride + 1
    Wo = (W - 1) // stride + 1
    need_x4d = downsample and stride > 1

    def kernel(*refs):
        idx = 0
        x2d_ref = refs[idx]; idx += 1
        x4d_ref = None
        if need_x4d:
            x4d_ref = refs[idx]; idx += 1
        (w1_ref, g1_ref, b1_ref,
         w2_ref, g2_ref, b2_ref,
         w3_ref, g3_ref, b3_ref) = refs[idx:idx + 9]
        idx += 9
        if downsample:
            wd_ref, gd_ref, bd_ref = refs[idx:idx + 3]
            idx += 3
        out_ref = refs[idx]
        pad_ref = refs[idx + 1]

        f32 = jnp.float32
        bf16 = jnp.bfloat16

        # ---- conv1 (1x1, no bias) + bn1 + relu : lane-dense MXU matmul ----
        x2d = x2d_ref[...]                                  # (N*H*W, Cip) bf16
        y1 = jnp.dot(x2d, w1_ref[...], preferred_element_type=f32)
        y1 = jnp.maximum(_bn_train(y1, g1_ref[...], b1_ref[...]), 0.0)

        # ---- write interior once; zero only the 1-pixel halo ----
        pad_ref[:, 1:H + 1, 1:W + 1, :] = y1.reshape(N, H, W, Cmp)
        zrow = jnp.zeros((N, 1, W + 2, Cmp), f32)
        pad_ref[:, 0:1, :, :] = zrow
        pad_ref[:, H + 1:H + 2, :, :] = zrow
        zcol = jnp.zeros((N, H, 1, Cmp), f32)
        pad_ref[:, 1:H + 1, 0:1, :] = zcol
        pad_ref[:, 1:H + 1, W + 1:W + 2, :] = zcol

        # ---- conv2 (3x3, padding=1, stride) as one im2col matmul, K = 9*Cmp ----
        taps = []
        for kh in range(3):
            for kw in range(3):
                if stride == 1:
                    taps.append(pad_ref[:, kh:kh + Ho, kw:kw + Wo, :])
                else:
                    taps.append(pad_ref[:, pl.ds(kh, Ho, stride),
                                        pl.ds(kw, Wo, stride), :])
        patches = jnp.concatenate(taps, axis=-1)            # (N, Ho, Wo, 9*Cmp)
        patches = patches.reshape(N * Ho * Wo, 9 * Cmp).astype(bf16)
        y2 = jnp.dot(patches, w2_ref[...], preferred_element_type=f32)
        y2 = jnp.maximum(_bn_train(y2, g2_ref[...], b2_ref[...]), 0.0)

        # ---- conv3 (1x1) + bn3 ----
        y3 = jnp.dot(y2.astype(bf16), w3_ref[...], preferred_element_type=f32)
        y3 = _bn_train(y3, g3_ref[...], b3_ref[...])

        # ---- shortcut ----
        if downsample:
            if stride == 1:
                xs = x2d
            else:
                xs = x4d_ref[:, pl.ds(0, Ho, stride), pl.ds(0, Wo, stride), :]
                xs = xs.reshape(N * Ho * Wo, Cip)
            res = jnp.dot(xs.astype(bf16), wd_ref[...],
                          preferred_element_type=f32)
            res = _bn_train(res, gd_ref[...], bd_ref[...])
        else:
            # identity shortcut: requires Cin == expansion*out_channels, stride==1
            res = x2d.astype(f32)

        out = jnp.maximum(y3 + res, 0.0)
        out_ref[...] = out.reshape(N, Ho, Wo, Cep)          # lane-dense store

    return kernel, Ho, Wo, need_x4d


def bottleneck_forward(x_nhwc, params, *, stride=1, downsample=False):
    N, H, W, Cin = x_nhwc.shape
    Cm = params["w1"].shape[1]
    Ce = params["w3"].shape[1]
    if not downsample:
        assert Cin == Ce and stride == 1, "identity shortcut needs matching shapes"

    bf16 = jnp.bfloat16
    Cip, Cmp, Cep = _round_up(Cin), _round_up(Cm), _round_up(Ce)

    kernel, Ho, Wo, need_x4d = _make_kernel(N, H, W, Cip, Cmp, Cep,
                                            stride, downsample)

    # ---- lane-dense (128-padded) bf16 weights, fp32 BN params ----
    w1p = _pad_axis(_pad_axis(params["w1"], 0, Cip), 1, Cmp).astype(bf16)
    g1p = _pad_axis(params["g1"], 1, Cmp, 1.0)
    b1p = _pad_axis(params["b1"], 1, Cmp, 0.0)
    w2p = _pad_axis(_pad_axis(params["w2"], 2, Cmp), 3, Cmp)       # (3,3,Cmp,Cmp)
    w2p = w2p.reshape(9 * Cmp, Cmp).astype(bf16)                   # im2col weight
    g2p = _pad_axis(params["g2"], 1, Cmp, 1.0)
    b2p = _pad_axis(params["b2"], 1, Cmp, 0.0)
    w3p = _pad_axis(_pad_axis(params["w3"], 0, Cmp), 1, Cep).astype(bf16)
    g3p = _pad_axis(params["g3"], 1, Cep, 1.0)
    b3p = _pad_axis(params["b3"], 1, Cep, 0.0)

    x_pad = _pad_axis(x_nhwc.astype(jnp.float32), 3, Cip)          # (N,H,W,Cip)
    x2d = x_pad.reshape(N * H * W, Cip).astype(bf16)

    inputs = [x2d]
    if need_x4d:
        inputs.append(x_pad)                                       # fp32, strided shortcut only
    inputs += [w1p, g1p, b1p, w2p, g2p, b2p, w3p, g3p, b3p]
    if downsample:
        wdp = _pad_axis(_pad_axis(params["wd"], 0, Cip), 1, Cep).astype(bf16)
        gdp = _pad_axis(params["gd"], 1, Cep, 1.0)
        bdp = _pad_axis(params["bd"], 1, Cep, 0.0)
        inputs += [wdp, gdp, bdp]

    vmem_spec = pl.BlockSpec(memory_space=pltpu.MemorySpace.VMEM)

    out_padded = pl.pallas_call(
        kernel,
        out_shape=jax.ShapeDtypeStruct((N, Ho, Wo, Cep), jnp.float32),
        in_specs=[vmem_spec] * len(inputs),
        out_specs=vmem_spec,
        scratch_shapes=[pltpu.VMEM((N, H + 2, W + 2, Cmp), jnp.float32)],
        compiler_params=pltpu.CompilerParams(
            vmem_limit_bytes=64 * 1024 * 1024),
    )(*inputs)

    return out_padded[..., :Ce]


def bottleneck_reference(x, params, *, stride=1, downsample=False):
    """Pure-JAX reference (lax convs + training-mode BN) mirroring the kernel's
    bf16 cast points (bf16 MXU operands, fp32 accumulation & BN)."""
    dn = ('NHWC', 'HWIO', 'NHWC')
    bf16 = jnp.bfloat16
    x = x.astype(bf16).astype(jnp.float32)   # same rounding as the kernel input

    def conv(x, w_hwio, s, pad):
        return jax.lax.conv_general_dilated(
            x.astype(bf16), w_hwio.astype(bf16), (s, s), pad,
            dimension_numbers=dn, preferred_element_type=jnp.float32)

    def bn(x, g, b):
        m = jnp.mean(x, axis=(0, 1, 2), keepdims=True)
        xc = x - m
        v = jnp.mean(xc * xc, axis=(0, 1, 2), keepdims=True)
        return (xc * (g.reshape(1, 1, 1, -1) * jax.lax.rsqrt(v + EPS))
                + b.reshape(1, 1, 1, -1))

    y = conv(x, params["w1"][None, None], 1, 'VALID')
    y = jax.nn.relu(bn(y, params["g1"], params["b1"]))
    y = conv(y, params["w2"], stride, ((1, 1), (1, 1)))
    y = jax.nn.relu(bn(y, params["g2"], params["b2"]))
    y = conv(y, params["w3"][None, None], 1, 'VALID')
    y = bn(y, params["g3"], params["b3"])
    if downsample:
        i = conv(x, params["wd"][None, None], stride, 'VALID')
        i = bn(i, params["gd"], params["bd"])
    else:
        i = x
    return jax.nn.relu(y + i)


if __name__ == "__main__":
    key = jax.random.PRNGKey(0)
    N, H, W = 2, 8, 8
    Cin, Cm = 8, 4            # in_channels=8, out_channels=4
    Ce = 4 * Cm               # expansion = 4
    stride, downsample = 1, True

    ks = jax.random.split(key, 14)
    params = {
        "w1": jax.random.normal(ks[0], (Cin, Cm), jnp.float32) * 0.1,
        "g1": jax.random.uniform(ks[1], (1, Cm), jnp.float32,
                                 minval=0.5, maxval=1.5),
        "b1": jax.random.normal(ks[2], (1, Cm), jnp.float32) * 0.1,
        "w2": jax.random.normal(ks[3], (3, 3, Cm, Cm), jnp.float32) * 0.1,
        "g2": jax.random.uniform(ks[4], (1, Cm), jnp.float32,
                                 minval=0.5, maxval=1.5),
        "b2": jax.random.normal(ks[5], (1, Cm), jnp.float32) * 0.1,
        "w3": jax.random.normal(ks[6], (Cm, Ce), jnp.float32) * 0.1,
        "g3": jax.random.uniform(ks[7], (1, Ce), jnp.float32,
                                 minval=0.5, maxval=1.5),
        "b3": jax.random.normal(ks[8], (1, Ce), jnp.float32) * 0.1,
        "wd": jax.random.normal(ks[9], (Cin, Ce), jnp.float32) * 0.1,
        "gd": jax.random.uniform(ks[10], (1, Ce), jnp.float32,
                                 minval=0.5, maxval=1.5),
        "bd": jax.random.normal(ks[11], (1, Ce), jnp.float32) * 0.1,
    }
    x = jax.random.normal(ks[13], (N, H, W, Cin), jnp.float32)

    out = bottleneck_forward(x, params, stride=stride, downsample=downsample)
    out = jax.block_until_ready(out)

    ref = bottleneck_reference(x, params, stride=stride, downsample=downsample)
    # Both paths use bf16 MXU operands (fp32 accumulation); bit-exactness is not
    # expected, only mixed-precision-level agreement.
    np.testing.assert_allclose(np.asarray(out), np.asarray(ref),
                               atol=1e-2, rtol=1e-2)
    print("KERNEL_OK")
</pallas_src>

<mosaic_0001>
module attributes {stable_mosaic.version = 11 : i64} {
  func.func @kernel(%arg0: memref<128x128xbf16, #tpu.memory_space<vmem>>, %arg1: memref<128x128xbf16, #tpu.memory_space<vmem>>, %arg2: memref<1x128xf32, #tpu.memory_space<vmem>>, %arg3: memref<1x128xf32, #tpu.memory_space<vmem>>, %arg4: memref<1152x128xbf16, #tpu.memory_space<vmem>>, %arg5: memref<1x128xf32, #tpu.memory_space<vmem>>, %arg6: memref<1x128xf32, #tpu.memory_space<vmem>>, %arg7: memref<128x128xbf16, #tpu.memory_space<vmem>>, %arg8: memref<1x128xf32, #tpu.memory_space<vmem>>, %arg9: memref<1x128xf32, #tpu.memory_space<vmem>>, %arg10: memref<128x128xbf16, #tpu.memory_space<vmem>>, %arg11: memref<1x128xf32, #tpu.memory_space<vmem>>, %arg12: memref<1x128xf32, #tpu.memory_space<vmem>>, %arg13: memref<2x8x8x128xf32, #tpu.memory_space<vmem>>, %arg14: memref<2x10x10x128xf32, #tpu.memory_space<vmem>>) attributes {dimension_semantics = [], scalar_prefetch = 0 : i64, scratch_operands = 1 : i64, tpu.core_type = #tpu.core_type<tc>} {
    %c0 = arith.constant 0 : index
    %c0_0 = arith.constant 0 : index
    %0 = vector.load %arg0[%c0, %c0_0] : memref<128x128xbf16, #tpu.memory_space<vmem>>, vector<128x128xbf16>
    %c0_1 = arith.constant 0 : index
    %c0_2 = arith.constant 0 : index
    %1 = vector.load %arg1[%c0_1, %c0_2] : memref<128x128xbf16, #tpu.memory_space<vmem>>, vector<128x128xbf16>
    %cst = arith.constant dense<0.000000e+00> : vector<128x128xf32>
    %2 = tpu.matmul %0, %1, %cst {dimension_numbers = #tpu.dot_dimension_numbers<[1], [0], [0], [1], [0, 0, 1, 1], [], []>} : vector<128x128xbf16>, vector<128x128xbf16>, vector<128x128xf32> -> vector<128x128xf32>
    %c0_3 = arith.constant 0 : index
    %c0_4 = arith.constant 0 : index
    %3 = vector.load %arg2[%c0_3, %c0_4] : memref<1x128xf32, #tpu.memory_space<vmem>>, vector<1x128xf32>
    %c0_5 = arith.constant 0 : index
    %c0_6 = arith.constant 0 : index
    %4 = vector.load %arg3[%c0_5, %c0_6] : memref<1x128xf32, #tpu.memory_space<vmem>>, vector<1x128xf32>
    %cst_7 = arith.constant dense<0.000000e+00> : vector<128xf32>
    %5 = vector.multi_reduction <add>, %2, %cst_7 [0] : vector<128x128xf32> to vector<128xf32>
    %6 = vector.shape_cast %5 : vector<128xf32> to vector<1x128xf32>
    %cst_8 = arith.constant 1.280000e+02 : f32
    %7 = vector.broadcast %cst_8 : f32 to vector<1x128xf32>
    %8 = arith.divf %6, %7 : vector<1x128xf32>
    %9 = vector.broadcast %8 : vector<1x128xf32> to vector<128x128xf32>
    %10 = arith.subf %2, %9 : vector<128x128xf32>
    %11 = arith.mulf %10, %10 : vector<128x128xf32>
    %cst_9 = arith.constant dense<0.000000e+00> : vector<128xf32>
    %12 = vector.multi_reduction <add>, %11, %cst_9 [0] : vector<128x128xf32> to vector<128xf32>
    %13 = vector.shape_cast %12 : vector<128xf32> to vector<1x128xf32>
    %cst_10 = arith.constant 1.280000e+02 : f32
    %14 = vector.broadcast %cst_10 : f32 to vector<1x128xf32>
    %15 = arith.divf %13, %14 : vector<1x128xf32>
    %cst_11 = arith.constant 9.99999974E-6 : f32
    %16 = vector.broadcast %cst_11 : f32 to vector<1x128xf32>
    %17 = arith.addf %15, %16 : vector<1x128xf32>
    %18 = math.rsqrt %17 : vector<1x128xf32>
    %19 = arith.mulf %3, %18 : vector<1x128xf32>
    %20 = vector.broadcast %19 : vector<1x128xf32> to vector<128x128xf32>
    %21 = arith.mulf %10, %20 : vector<128x128xf32>
    %22 = vector.broadcast %4 : vector<1x128xf32> to vector<128x128xf32>
    %23 = arith.addf %21, %22 : vector<128x128xf32>
    %cst_12 = arith.constant 0.000000e+00 : f32
    %24 = vector.broadcast %cst_12 : f32 to vector<128x128xf32>
    %25 = arith.maximumf %23, %24 : vector<128x128xf32>
    %26 = vector.shape_cast %25 : vector<128x128xf32> to vector<2x8x8x128xf32>
    %c0_13 = arith.constant 0 : index
    %c1 = arith.constant 1 : index
    %c1_14 = arith.constant 1 : index
    %c0_15 = arith.constant 0 : index
    %27 = vector.load %arg14[%c0_13, %c1, %c1_14, %c0_15] : memref<2x10x10x128xf32, #tpu.memory_space<vmem>>, vector<2x8x8x128xf32>
    tpu.vector_store %arg14[%c0_13, %c1, %c1_14, %c0_15], %26 {strides = array<i32>} : memref<2x10x10x128xf32, #tpu.memory_space<vmem>>, vector<2x8x8x128xf32>,
    %cst_16 = arith.constant 0.000000e+00 : f32
    %28 = vector.broadcast %cst_16 : f32 to vector<2x1x10x128xf32>
    %c0_17 = arith.constant 0 : index
    %c0_18 = arith.constant 0 : index
    %c0_19 = arith.constant 0 : index
    %c0_20 = arith.constant 0 : index
    %29 = vector.load %arg14[%c0_17, %c0_18, %c0_19, %c0_20] : memref<2x10x10x128xf32, #tpu.memory_space<vmem>>, vector<2x1x10x128xf32>
    tpu.vector_store %arg14[%c0_17, %c0_18, %c0_19, %c0_20], %28 {strides = array<i32>} : memref<2x10x10x128xf32, #tpu.memory_space<vmem>>, vector<2x1x10x128xf32>,
    %c0_21 = arith.constant 0 : index
    %c9 = arith.constant 9 : index
    %c0_22 = arith.constant 0 : index
    %c0_23 = arith.constant 0 : index
    %30 = vector.load %arg14[%c0_21, %c9, %c0_22, %c0_23] : memref<2x10x10x128xf32, #tpu.memory_space<vmem>>, vector<2x1x10x128xf32>
    tpu.vector_store %arg14[%c0_21, %c9, %c0_22, %c0_23], %28 {strides = array<i32>} : memref<2x10x10x128xf32, #tpu.memory_space<vmem>>, vector<2x1x10x128xf32>,
    %cst_24 = arith.constant 0.000000e+00 : f32
    %31 = vector.broadcast %cst_24 : f32 to vector<2x8x1x128xf32>
    %c0_25 = arith.constant 0 : index
    %c1_26 = arith.constant 1 : index
    %c0_27 = arith.constant 0 : index
    %c0_28 = arith.constant 0 : index
    %32 = vector.load %arg14[%c0_25, %c1_26, %c0_27, %c0_28] : memref<2x10x10x128xf32, #tpu.memory_space<vmem>>, vector<2x8x1x128xf32>
    tpu.vector_store %arg14[%c0_25, %c1_26, %c0_27, %c0_28], %31 {strides = array<i32>} : memref<2x10x10x128xf32, #tpu.memory_space<vmem>>, vector<2x8x1x128xf32>,
    %c0_29 = arith.constant 0 : index
    %c1_30 = arith.constant 1 : index
    %c9_31 = arith.constant 9 : index
    %c0_32 = arith.constant 0 : index
    %33 = vector.load %arg14[%c0_29, %c1_30, %c9_31, %c0_32] : memref<2x10x10x128xf32, #tpu.memory_space<vmem>>, vector<2x8x1x128xf32>
    tpu.vector_store %arg14[%c0_29, %c1_30, %c9_31, %c0_32], %31 {strides = array<i32>} : memref<2x10x10x128xf32, #tpu.memory_space<vmem>>, vector<2x8x1x128xf32>,
    %c0_33 = arith.constant 0 : index
    %c0_34 = arith.constant 0 : index
    %c0_35 = arith.constant 0 : index
    %c0_36 = arith.constant 0 : index
    %34 = vector.load %arg14[%c0_33, %c0_34, %c0_35, %c0_36] : memref<2x10x10x128xf32, #tpu.memory_space<vmem>>, vector<2x8x8x128xf32>
    %c0_37 = arith.constant 0 : index
    %c0_38 = arith.constant 0 : index
    %c1_39 = arith.constant 1 : index
    %c0_40 = arith.constant 0 : index
    %35 = vector.load %arg14[%c0_37, %c0_38, %c1_39, %c0_40] : memref<2x10x10x128xf32, #tpu.memory_space<vmem>>, vector<2x8x8x128xf32>
    %c0_41 = arith.constant 0 : index
    %c0_42 = arith.constant 0 : index
    %c2 = arith.constant 2 : index
    %c0_43 = arith.constant 0 : index
    %36 = vector.load %arg14[%c0_41, %c0_42, %c2, %c0_43] : memref<2x10x10x128xf32, #tpu.memory_space<vmem>>, vector<2x8x8x128xf32>
    %c0_44 = arith.constant 0 : index
    %c1_45 = arith.constant 1 : index
    %c0_46 = arith.constant 0 : index
    %c0_47 = arith.constant 0 : index
    %37 = vector.load %arg14[%c0_44, %c1_45, %c0_46, %c0_47] : memref<2x10x10x128xf32, #tpu.memory_space<vmem>>, vector<2x8x8x128xf32>
    %c0_48 = arith.constant 0 : index
    %c1_49 = arith.constant 1 : index
    %c1_50 = arith.constant 1 : index
    %c0_51 = arith.constant 0 : index
    %38 = vector.load %arg14[%c0_48, %c1_49, %c1_50, %c0_51] : memref<2x10x10x128xf32, #tpu.memory_space<vmem>>, vector<2x8x8x128xf32>
    %c0_52 = arith.constant 0 : index
    %c1_53 = arith.constant 1 : index
    %c2_54 = arith.constant 2 : index
    %c0_55 = arith.constant 0 : index
    %39 = vector.load %arg14[%c0_52, %c1_53, %c2_54, %c0_55] : memref<2x10x10x128xf32, #tpu.memory_space<vmem>>, vector<2x8x8x128xf32>
    %c0_56 = arith.constant 0 : index
    %c2_57 = arith.constant 2 : index
    %c0_58 = arith.constant 0 : index
    %c0_59 = arith.constant 0 : index
    %40 = vector.load %arg14[%c0_56, %c2_57, %c0_58, %c0_59] : memref<2x10x10x128xf32, #tpu.memory_space<vmem>>, vector<2x8x8x128xf32>
    %c0_60 = arith.constant 0 : index
    %c2_61 = arith.constant 2 : index
    %c1_62 = arith.constant 1 : index
    %c0_63 = arith.constant 0 : index
    %41 = vector.load %arg14[%c0_60, %c2_61, %c1_62, %c0_63] : memref<2x10x10x128xf32, #tpu.memory_space<vmem>>, vector<2x8x8x128xf32>
    %c0_64 = arith.constant 0 : index
    %c2_65 = arith.constant 2 : index
    %c2_66 = arith.constant 2 : index
    %c0_67 = arith.constant 0 : index
    %42 = vector.load %arg14[%c0_64, %c2_65, %c2_66, %c0_67] : memref<2x10x10x128xf32, #tpu.memory_space<vmem>>, vector<2x8x8x128xf32>
    %43 = tpu.concatenate %34, %35, %36, %37, %38, %39, %40, %41, %42 in 3 : vector<2x8x8x128xf32>, vector<2x8x8x128xf32>, vector<2x8x8x128xf32>, vector<2x8x8x128xf32>, vector<2x8x8x128xf32>, vector<2x8x8x128xf32>, vector<2x8x8x128xf32>, vector<2x8x8x128xf32>, vector<2x8x8x128xf32> -> vector<2x8x8x1152xf32>
    %44 = vector.shape_cast %43 : vector<2x8x8x1152xf32> to vector<128x1152xf32>
    %45 = arith.truncf %44 : vector<128x1152xf32> to vector<128x1152xbf16>
    %c0_68 = arith.constant 0 : index
    %c0_69 = arith.constant 0 : index
    %46 = vector.load %arg4[%c0_68, %c0_69] : memref<1152x128xbf16, #tpu.memory_space<vmem>>, vector<1152x128xbf16>
    %cst_70 = arith.constant dense<0.000000e+00> : vector<128x128xf32>
    %47 = tpu.matmul %45, %46, %cst_70 {dimension_numbers = #tpu.dot_dimension_numbers<[1], [0], [0], [1], [0, 0, 1, 1], [], []>} : vector<128x1152xbf16>, vector<1152x128xbf16>, vector<128x128xf32> -> vector<128x128xf32>
    %c0_71 = arith.constant 0 : index
    %c0_72 = arith.constant 0 : index
    %48 = vector.load %arg5[%c0_71, %c0_72] : memref<1x128xf32, #tpu.memory_space<vmem>>, vector<1x128xf32>
    %c0_73 = arith.constant 0 : index
    %c0_74 = arith.constant 0 : index
    %49 = vector.load %arg6[%c0_73, %c0_74] : memref<1x128xf32, #tpu.memory_space<vmem>>, vector<1x128xf32>
    %cst_75 = arith.constant dense<0.000000e+00> : vector<128xf32>
    %50 = vector.multi_reduction <add>, %47, %cst_75 [0] : vector<128x128xf32> to vector<128xf32>
    %51 = vector.shape_cast %50 : vector<128xf32> to vector<1x128xf32>
    %cst_76 = arith.constant 1.280000e+02 : f32
    %52 = vector.broadcast %cst_76 : f32 to vector<1x128xf32>
    %53 = arith.divf %51, %52 : vector<1x128xf32>
    %54 = vector.broadcast %53 : vector<1x128xf32> to vector<128x128xf32>
    %55 = arith.subf %47, %54 : vector<128x128xf32>
    %56 = arith.mulf %55, %55 : vector<128x128xf32>
    %cst_77 = arith.constant dense<0.000000e+00> : vector<128xf32>
    %57 = vector.multi_reduction <add>, %56, %cst_77 [0] : vector<128x128xf32> to vector<128xf32>
    %58 = vector.shape_cast %57 : vector<128xf32> to vector<1x128xf32>
    %cst_78 = arith.constant 1.280000e+02 : f32
    %59 = vector.broadcast %cst_78 : f32 to vector<1x128xf32>
    %60 = arith.divf %58, %59 : vector<1x128xf32>
    %cst_79 = arith.constant 9.99999974E-6 : f32
    %61 = vector.broadcast %cst_79 : f32 to vector<1x128xf32>
    %62 = arith.addf %60, %61 : vector<1x128xf32>
    %63 = math.rsqrt %62 : vector<1x128xf32>
    %64 = arith.mulf %48, %63 : vector<1x128xf32>
    %65 = vector.broadcast %64 : vector<1x128xf32> to vector<128x128xf32>
    %66 = arith.mulf %55, %65 : vector<128x128xf32>
    %67 = vector.broadcast %49 : vector<1x128xf32> to vector<128x128xf32>
    %68 = arith.addf %66, %67 : vector<128x128xf32>
    %cst_80 = arith.constant 0.000000e+00 : f32
    %69 = vector.broadcast %cst_80 : f32 to vector<128x128xf32>
    %70 = arith.maximumf %68, %69 : vector<128x128xf32>
    %71 = arith.truncf %70 : vector<128x128xf32> to vector<128x128xbf16>
    %c0_81 = arith.constant 0 : index
    %c0_82 = arith.constant 0 : index
    %72 = vector.load %arg7[%c0_81, %c0_82] : memref<128x128xbf16, #tpu.memory_space<vmem>>, vector<128x128xbf16>
    %cst_83 = arith.constant dense<0.000000e+00> : vector<128x128xf32>
    %73 = tpu.matmul %71, %72, %cst_83 {dimension_numbers = #tpu.dot_dimension_numbers<[1], [0], [0], [1], [0, 0, 1, 1], [], []>} : vector<128x128xbf16>, vector<128x128xbf16>, vector<128x128xf32> -> vector<128x128xf32>
    %c0_84 = arith.constant 0 : index
    %c0_85 = arith.constant 0 : index
    %74 = vector.load %arg8[%c0_84, %c0_85] : memref<1x128xf32, #tpu.memory_space<vmem>>, vector<1x128xf32>
    %c0_86 = arith.constant 0 : index
    %c0_87 = arith.constant 0 : index
    %75 = vector.load %arg9[%c0_86, %c0_87] : memref<1x128xf32, #tpu.memory_space<vmem>>, vector<1x128xf32>
    %cst_88 = arith.constant dense<0.000000e+00> : vector<128xf32>
    %76 = vector.multi_reduction <add>, %73, %cst_88 [0] : vector<128x128xf32> to vector<128xf32>
    %77 = vector.shape_cast %76 : vector<128xf32> to vector<1x128xf32>
    %cst_89 = arith.constant 1.280000e+02 : f32
    %78 = vector.broadcast %cst_89 : f32 to vector<1x128xf32>
    %79 = arith.divf %77, %78 : vector<1x128xf32>
    %80 = vector.broadcast %79 : vector<1x128xf32> to vector<128x128xf32>
    %81 = arith.subf %73, %80 : vector<128x128xf32>
    %82 = arith.mulf %81, %81 : vector<128x128xf32>
    %cst_90 = arith.constant dense<0.000000e+00> : vector<128xf32>
    %83 = vector.multi_reduction <add>, %82, %cst_90 [0] : vector<128x128xf32> to vector<128xf32>
    %84 = vector.shape_cast %83 : vector<128xf32> to vector<1x128xf32>
    %cst_91 = arith.constant 1.280000e+02 : f32
    %85 = vector.broadcast %cst_91 : f32 to vector<1x128xf32>
    %86 = arith.divf %84, %85 : vector<1x128xf32>
    %cst_92 = arith.constant 9.99999974E-6 : f32
    %87 = vector.broadcast %cst_92 : f32 to vector<1x128xf32>
    %88 = arith.addf %86, %87 : vector<1x128xf32>
    %89 = math.rsqrt %88 : vector<1x128xf32>
    %90 = arith.mulf %74, %89 : vector<1x128xf32>
    %91 = vector.broadcast %90 : vector<1x128xf32> to vector<128x128xf32>
    %92 = arith.mulf %81, %91 : vector<128x128xf32>
    %93 = vector.broadcast %75 : vector<1x128xf32> to vector<128x128xf32>
    %94 = arith.addf %92, %93 : vector<128x128xf32>
    %c0_93 = arith.constant 0 : index
    %c0_94 = arith.constant 0 : index
    %95 = vector.load %arg10[%c0_93, %c0_94] : memref<128x128xbf16, #tpu.memory_space<vmem>>, vector<128x128xbf16>
    %cst_95 = arith.constant dense<0.000000e+00> : vector<128x128xf32>
    %96 = tpu.matmul %0, %95, %cst_95 {dimension_numbers = #tpu.dot_dimension_numbers<[1], [0], [0], [1], [0, 0, 1, 1], [], []>} : vector<128x128xbf16>, vector<128x128xbf16>, vector<128x128xf32> -> vector<128x128xf32>
    %c0_96 = arith.constant 0 : index
    %c0_97 = arith.constant 0 : index
    %97 = vector.load %arg11[%c0_96, %c0_97] : memref<1x128xf32, #tpu.memory_space<vmem>>, vector<1x128xf32>
    %c0_98 = arith.constant 0 : index
    %c0_99 = arith.constant 0 : index
    %98 = vector.load %arg12[%c0_98, %c0_99] : memref<1x128xf32, #tpu.memory_space<vmem>>, vector<1x128xf32>
    %cst_100 = arith.constant dense<0.000000e+00> : vector<128xf32>
    %99 = vector.multi_reduction <add>, %96, %cst_100 [0] : vector<128x128xf32> to vector<128xf32>
    %100 = vector.shape_cast %99 : vector<128xf32> to vector<1x128xf32>
    %cst_101 = arith.constant 1.280000e+02 : f32
    %101 = vector.broadcast %cst_101 : f32 to vector<1x128xf32>
    %102 = arith.divf %100, %101 : vector<1x128xf32>
    %103 = vector.broadcast %102 : vector<1x128xf32> to vector<128x128xf32>
    %104 = arith.subf %96, %103 : vector<128x128xf32>
    %105 = arith.mulf %104, %104 : vector<128x128xf32>
    %cst_102 = arith.constant dense<0.000000e+00> : vector<128xf32>
    %106 = vector.multi_reduction <add>, %105, %cst_102 [0] : vector<128x128xf32> to vector<128xf32>
    %107 = vector.shape_cast %106 : vector<128xf32> to vector<1x128xf32>
    %cst_103 = arith.constant 1.280000e+02 : f32
    %108 = vector.broadcast %cst_103 : f32 to vector<1x128xf32>
    %109 = arith.divf %107, %108 : vector<1x128xf32>
    %cst_104 = arith.constant 9.99999974E-6 : f32
    %110 = vector.broadcast %cst_104 : f32 to vector<1x128xf32>
    %111 = arith.addf %109, %110 : vector<1x128xf32>
    %112 = math.rsqrt %111 : vector<1x128xf32>
    %113 = arith.mulf %97, %112 : vector<1x128xf32>
    %114 = vector.broadcast %113 : vector<1x128xf32> to vector<128x128xf32>
    %115 = arith.mulf %104, %114 : vector<128x128xf32>
    %116 = vector.broadcast %98 : vector<1x128xf32> to vector<128x128xf32>
    %117 = arith.addf %115, %116 : vector<128x128xf32>
    %118 = arith.addf %94, %117 : vector<128x128xf32>
    %cst_105 = arith.constant 0.000000e+00 : f32
    %119 = vector.broadcast %cst_105 : f32 to vector<128x128xf32>
    %120 = arith.maximumf %118, %119 : vector<128x128xf32>
    %121 = vector.shape_cast %120 : vector<128x128xf32> to vector<2x8x8x128xf32>
    %c0_106 = arith.constant 0 : index
    %c0_107 = arith.constant 0 : index
    %c0_108 = arith.constant 0 : index
    %c0_109 = arith.constant 0 : index
    %122 = vector.load %arg13[%c0_106, %c0_107, %c0_108, %c0_109] : memref<2x8x8x128xf32, #tpu.memory_space<vmem>>, vector<2x8x8x128xf32>
    tpu.vector_store %arg13[%c0_106, %c0_107, %c0_108, %c0_109], %121 {strides = array<i32>} : memref<2x8x8x128xf32, #tpu.memory_space<vmem>>, vector<2x8x8x128xf32>,
    return
  }
}

</mosaic_0001>

<llo_original>
// kernel: tpu_custom_call.1
$region0: #{tpu_custom_call.1}
  #allocation0 [shape = 'u32[]', space=smem, size = 0x4, offset = 0x4, fixed_abs, tag = 'smem constant byte address 0x4 - core index']
  #allocation1 [shape = 'u32[144,128]{1,0:T(1,128)}', space=vmem, size = 0x12000, scoped, tag = 'internal scratch']
  #allocation2 [shape = 'f32[2,10,10,128]{3,2,1,0:T(8,128)}', space=vmem, size = 0x28000, scoped, tag = 'scratch operand']
  %s0 = inlined_call_operand.hbm [shape: bf16[128,128], index: 0, kind: input, shape index: {}]
  %s1 = inlined_call_operand.hbm [shape: bf16[128,128], index: 1, kind: input, shape index: {}]
  %s2 = inlined_call_operand.vmem [shape: f32[1,128], index: 2, kind: input, shape index: {}]
  %s3 = inlined_call_operand.vmem [shape: f32[1,128], index: 3, kind: input, shape index: {}]
  %s4 = inlined_call_operand.hbm [shape: bf16[1152,128], index: 4, kind: input, shape index: {}]
  %s5 = inlined_call_operand.vmem [shape: f32[1,128], index: 5, kind: input, shape index: {}]
  %s6 = inlined_call_operand.vmem [shape: f32[1,128], index: 6, kind: input, shape index: {}]
  %s7 = inlined_call_operand.hbm [shape: bf16[128,128], index: 7, kind: input, shape index: {}]
  %s8 = inlined_call_operand.vmem [shape: f32[1,128], index: 8, kind: input, shape index: {}]
  %s9 = inlined_call_operand.vmem [shape: f32[1,128], index: 9, kind: input, shape index: {}]
  %s10 = inlined_call_operand.hbm [shape: bf16[128,128], index: 10, kind: input, shape index: {}]
  %s11 = inlined_call_operand.vmem [shape: f32[1,128], index: 11, kind: input, shape index: {}]
  %s12 = inlined_call_operand.vmem [shape: f32[1,128], index: 12, kind: input, shape index: {}]
  %s13 = inlined_call_operand.hbm [shape: f32[2,8,8,128], index: 13, kind: output, shape index: {}]
  %s14 = sld [smem:[#allocation0]]
  $region82: #{tpu_custom_call.1} parent=0
    _
  %s16 = ssub.s32 1, %s14
  %s17 = scalar_select 0, %s16, %s14
  $region1: #{tpu_custom_call.1} parent=0
    #allocation3 [shape = 'u8[32768]{0}', space=vmem, size = 0x8000, scoped, tag = 'input window, operand 0, single buffered']
    #allocation4 [shape = 's32[1]{0}', space=sflag, size = 0x4, scoped, tag = 'scoped memory for tpu_custom_call.1']
    #allocation5 [shape = 's32[1]{0}', space=sflag, size = 0x4, scoped, tag = 'scoped memory for tpu_custom_call.1']
    #allocation6 [shape = 'u8[32768]{0}', space=vmem, size = 0x8000, scoped, tag = 'input window, operand 1, single buffered']
    #allocation7 [shape = 's32[1]{0}', space=sflag, size = 0x4, scoped, tag = 'scoped memory for tpu_custom_call.1']
    #allocation8 [shape = 'u8[294912]{0}', space=vmem, size = 0x48000, scoped, tag = 'input window, operand 4, single buffered']
    #allocation9 [shape = 'u8[32768]{0}', space=vmem, size = 0x8000, scoped, tag = 'input window, operand 7, single buffered']
    #allocation10 [shape = 's32[1]{0}', space=sflag, size = 0x4, scoped, tag = 'scoped memory for tpu_custom_call.1']
    #allocation11 [shape = 'u8[32768]{0}', space=vmem, size = 0x8000, scoped, tag = 'input window, operand 10, single buffered']
    #allocation12 [shape = 'u8[65536]{0}', space=vmem, size = 0x10000, scoped, tag = 'output window, operand 0, single buffered']
    %18 = vsyncpa [#allocation4], 0
    %19 = vsyncpa [#allocation7], 0
    %20 = vsyncpa [#allocation10], 0
    %21 = vsyncpa [#allocation5], 0
    // Predicated region
    $region2: #{tpu_custom_call.1} parent=1 // pred_check
      _
    $region3: #{tpu_custom_call.1} parent=1 // pred_check_branch
      %23 = sbr.rel (0) target = $region5
    $region4: #{tpu_custom_call.1} parent=1 // pred_region
      %s25 = ssub.s32 1024, 1024
      %26 = vsyncadd [#allocation4], %s25
      %s27 = sshll.u32 [#allocation3], 4
      %s28 = int_to_ptr.vmem [resolvable:$true] %s27
      %33 = dma.hbm_to_vmem [thread:$0]  %s0, 1024, %s28, [#allocation4], 64, 64, 4
    $region5: #{tpu_custom_call.1} parent=1 // pred_fallthru
      _
    // Predicated region
    $region6: #{tpu_custom_call.1} parent=1 // pred_check
      _
    $region7: #{tpu_custom_call.1} parent=1 // pred_check_branch
      %35 = sbr.rel (0) target = $region9
    $region8: #{tpu_custom_call.1} parent=1 // pred_region
      %s37 = ssub.s32 1024, 1024
      %38 = vsyncadd [#allocation7], %s37
      %s39 = sshll.u32 [#allocation6], 4
      %s40 = int_to_ptr.vmem [resolvable:$true] %s39
      %45 = dma.hbm_to_vmem [thread:$0]  %s1, 1024, %s40, [#allocation7], 64, 64, 4
    $region9: #{tpu_custom_call.1} parent=1 // pred_fallthru
      _
    // Predicated region
    $region10: #{tpu_custom_call.1} parent=1 // pred_check
      _
    $region11: #{tpu_custom_call.1} parent=1 // pred_check_branch
      %47 = sbr.rel (0) target = $region13
    $region12: #{tpu_custom_call.1} parent=1 // pred_region
      _
    $region13: #{tpu_custom_call.1} parent=1 // pred_fallthru
      _
    // Predicated region
    $region14: #{tpu_custom_call.1} parent=1 // pred_check
      _
    $region15: #{tpu_custom_call.1} parent=1 // pred_check_branch
      %49 = sbr.rel (0) target = $region17
    $region16: #{tpu_custom_call.1} parent=1 // pred_region
      _
    $region17: #{tpu_custom_call.1} parent=1 // pred_fallthru
      _
    // Predicated region
    $region18: #{tpu_custom_call.1} parent=1 // pred_check
      _
    $region19: #{tpu_custom_call.1} parent=1 // pred_check_branch
      %51 = sbr.rel (0) target = $region21
    $region20: #{tpu_custom_call.1} parent=1 // pred_region
      %s53 = ssub.s32 9216, 9216
      %54 = vsyncadd [#allocation7], %s53
      %s55 = sshll.u32 [#allocation8], 4
      %s56 = int_to_ptr.vmem [resolvable:$true] %s55
      %61 = dma.hbm_to_vmem [thread:$0]  %s4, 9216, %s56, [#allocation7], 64, 64, 4
    $region21: #{tpu_custom_call.1} parent=1 // pred_fallthru
      _
    // Predicated region
    $region22: #{tpu_custom_call.1} parent=1 // pred_check
      _
    $region23: #{tpu_custom_call.1} parent=1 // pred_check_branch
      %63 = sbr.rel (0) target = $region25
    $region24: #{tpu_custom_call.1} parent=1 // pred_region
      _
    $region25: #{tpu_custom_call.1} parent=1 // pred_fallthru
      _
    // Predicated region
    $region26: #{tpu_custom_call.1} parent=1 // pred_check
      _
    $region27: #{tpu_custom_call.1} parent=1 // pred_check_branch
      %65 = sbr.rel (0) target = $region29
    $region28: #{tpu_custom_call.1} parent=1 // pred_region
      _
    $region29: #{tpu_custom_call.1} parent=1 // pred_fallthru
      _
    // Predicated region
    $region30: #{tpu_custom_call.1} parent=1 // pred_check
      _
    $region31: #{tpu_custom_call.1} parent=1 // pred_check_branch
      %67 = sbr.rel (0) target = $region33
    $region32: #{tpu_custom_call.1} parent=1 // pred_region
      %s69 = ssub.s32 1024, 1024
      %70 = vsyncadd [#allocation10], %s69
      %s71 = sshll.u32 [#allocation9], 4
      %s72 = int_to_ptr.vmem [resolvable:$true] %s71
      %77 = dma.hbm_to_vmem [thread:$0]  %s7, 1024, %s72, [#allocation10], 64, 64, 4
    $region33: #{tpu_custom_call.1} parent=1 // pred_fallthru
      _
    // Predicated region
    $region34: #{tpu_custom_call.1} parent=1 // pred_check
      _
    $region35: #{tpu_custom_call.1} parent=1 // pred_check_branch
      %79 = sbr.rel (0) target = $region37
    $region36: #{tpu_custom_call.1} parent=1 // pred_region
      _
    $region37: #{tpu_custom_call.1} parent=1 // pred_fallthru
      _
    // Predicated region
    $region38: #{tpu_custom_call.1} parent=1 // pred_check
      _
    $region39: #{tpu_custom_call.1} parent=1 // pred_check_branch
      %81 = sbr.rel (0) target = $region41
    $region40: #{tpu_custom_call.1} parent=1 // pred_region
      _
    $region41: #{tpu_custom_call.1} parent=1 // pred_fallthru
      _
    // Predicated region
    $region42: #{tpu_custom_call.1} parent=1 // pred_check
      _
    $region43: #{tpu_custom_call.1} parent=1 // pred_check_branch
      %83 = sbr.rel (0) target = $region45
    $region44: #{tpu_custom_call.1} parent=1 // pred_region
      %s85 = ssub.s32 1024, 1024
      %86 = vsyncadd [#allocation10], %s85
      %s87 = sshll.u32 [#allocation11], 4
      %s88 = int_to_ptr.vmem [resolvable:$true] %s87
      %93 = dma.hbm_to_vmem [thread:$0]  %s10, 1024, %s88, [#allocation10], 64, 64, 4
    $region45: #{tpu_custom_call.1} parent=1 // pred_fallthru
      _
    // Predicated region
    $region46: #{tpu_custom_call.1} parent=1 // pred_check
      _
    $region47: #{tpu_custom_call.1} parent=1 // pred_check_branch
      %95 = sbr.rel (0) target = $region49
    $region48: #{tpu_custom_call.1} parent=1 // pred_region
      _
    $region49: #{tpu_custom_call.1} parent=1 // pred_fallthru
      _
    // Predicated region
    $region50: #{tpu_custom_call.1} parent=1 // pred_check
      _
    $region51: #{tpu_custom_call.1} parent=1 // pred_check_branch
      %97 = sbr.rel (0) target = $region53
    $region52: #{tpu_custom_call.1} parent=1 // pred_region
      _
    $region53: #{tpu_custom_call.1} parent=1 // pred_fallthru
      _
    // Predicated region
    $region54: #{tpu_custom_call.1} parent=1 // pred_check
      _
    $region55: #{tpu_custom_call.1} parent=1 // pred_check_branch
      %99 = sbr.rel (0) target = $region57
    $region56: #{tpu_custom_call.1} parent=1 // pred_region
      %100 = dma.done [#allocation4], 1024
    $region57: #{tpu_custom_call.1} parent=1 // pred_fallthru
      _
    // Predicated region
    $region58: #{tpu_custom_call.1} parent=1 // pred_check
      _
    $region59: #{tpu_custom_call.1} parent=1 // pred_check_branch
      %102 = sbr.rel (0) target = $region61
    $region60: #{tpu_custom_call.1} parent=1 // pred_region
      %103 = dma.done [#allocation7], 1024
    $region61: #{tpu_custom_call.1} parent=1 // pred_fallthru
      _
    // Predicated region
    $region62: #{tpu_custom_call.1} parent=1 // pred_check
      _
    $region63: #{tpu_custom_call.1} parent=1 // pred_check_branch
      %105 = sbr.rel (0) target = $region65
    $region64: #{tpu_custom_call.1} parent=1 // pred_region
      %106 = dma.done [#allocation7], 9216
    $region65: #{tpu_custom_call.1} parent=1 // pred_fallthru
      _
    // Predicated region
    $region66: #{tpu_custom_call.1} parent=1 // pred_check
      _
    $region67: #{tpu_custom_call.1} parent=1 // pred_check_branch
      %108 = sbr.rel (0) target = $region69
    $region68: #{tpu_custom_call.1} parent=1 // pred_region
      %109 = dma.done [#allocation10], 1024
    $region69: #{tpu_custom_call.1} parent=1 // pred_fallthru
      _
    // Predicated region
    $region70: #{tpu_custom_call.1} parent=1 // pred_check
      _
    $region71: #{tpu_custom_call.1} parent=1 // pred_check_branch
      %111 = sbr.rel (0) target = $region73
    $region72: #{tpu_custom_call.1} parent=1 // pred_region
      %112 = dma.done [#allocation10], 1024
    $region73: #{tpu_custom_call.1} parent=1 // pred_fallthru
      _
    %v114 = vld [vmem:[#allocation3] sm:$0xf]
    %v115 = vld [vmem:[#allocation3 + $0x4] sm:$0xf]
    %v116 = vld [vmem:[#allocation3 + $0x8] sm:$0xf]
    %v117 = vld [vmem:[#allocation3 + $0xc] sm:$0xf]
    %v118 = vld [vmem:[#allocation3 + $0x10] sm:$0xf]
    %v119 = vld [vmem:[#allocation3 + $0x14] sm:$0xf]
    %v120 = vld [vmem:[#allocation3 + $0x18] sm:$0xf]
    %v121 = vld [vmem:[#allocation3 + $0x1c] sm:$0xf]
    %v122 = vld [vmem:[#allocation3 + $0x20] sm:$0xf]
    %v123 = vld [vmem:[#allocation3 + $0x24] sm:$0xf]
    %v124 = vld [vmem:[#allocation3 + $0x28] sm:$0xf]
    %v125 = vld [vmem:[#allocation3 + $0x2c] sm:$0xf]
    %v126 = vld [vmem:[#allocation3 + $0x30] sm:$0xf]
    %v127 = vld [vmem:[#allocation3 + $0x34] sm:$0xf]
    %v128 = vld [vmem:[#allocation3 + $0x38] sm:$0xf]
    %v129 = vld [vmem:[#allocation3 + $0x3c] sm:$0xf]
    %v130 = vld [vmem:[#allocation6] sm:$0xf]
    %v131 = vld [vmem:[#allocation6 + $0x4] sm:$0xf]
    %v132 = vld [vmem:[#allocation6 + $0x8] sm:$0xf]
    %v133 = vld [vmem:[#allocation6 + $0xc] sm:$0xf]
    %v134 = vld [vmem:[#allocation6 + $0x10] sm:$0xf]
    %v135 = vld [vmem:[#allocation6 + $0x14] sm:$0xf]
    %v136 = vld [vmem:[#allocation6 + $0x18] sm:$0xf]
    %v137 = vld [vmem:[#allocation6 + $0x1c] sm:$0xf]
    %v138 = vld [vmem:[#allocation6 + $0x20] sm:$0xf]
    %v139 = vld [vmem:[#allocation6 + $0x24] sm:$0xf]
    %v140 = vld [vmem:[#allocation6 + $0x28] sm:$0xf]
    %v141 = vld [vmem:[#allocation6 + $0x2c] sm:$0xf]
    %v142 = vld [vmem:[#allocation6 + $0x30] sm:$0xf]
    %v143 = vld [vmem:[#allocation6 + $0x34] sm:$0xf]
    %v144 = vld [vmem:[#allocation6 + $0x38] sm:$0xf]
    %v145 = vld [vmem:[#allocation6 + $0x3c] sm:$0xf]
    %v162 = vunpack.c.l.b16 %v114
    %v163 = vunpack.c.l.b16 %v115
    %v164 = vunpack.c.l.b16 %v116
    %v165 = vunpack.c.l.b16 %v117
    %v166 = vunpack.c.l.b16 %v118
    %v167 = vunpack.c.l.b16 %v119
    %v168 = vunpack.c.l.b16 %v120
    %v169 = vunpack.c.l.b16 %v121
    %v170 = vunpack.c.l.b16 %v122
    %v171 = vunpack.c.l.b16 %v123
    %v172 = vunpack.c.l.b16 %v124
    %v173 = vunpack.c.l.b16 %v125
    %v174 = vunpack.c.l.b16 %v126
    %v175 = vunpack.c.l.b16 %v127
    %v176 = vunpack.c.l.b16 %v128
    %v177 = vunpack.c.l.b16 %v129
    %v178 = vpack.c.b16 %v163, %v162
    %v179 = vpack.c.b16 %v165, %v164
    %v180 = vpack.c.b16 %v167, %v166
    %v181 = vpack.c.b16 %v169, %v168
    %v182 = vpack.c.b16 %v171, %v170
    %v183 = vpack.c.b16 %v173, %v172
    %v184 = vpack.c.b16 %v175, %v174
    %v185 = vpack.c.b16 %v177, %v176
    %v210 = vunpack.c.l.b16 %v130
    %v211 = vunpack.c.l.b16 %v131
    %v212 = vunpack.c.l.b16 %v132
    %v213 = vunpack.c.l.b16 %v133
    %v214 = vunpack.c.l.b16 %v134
    %v215 = vunpack.c.l.b16 %v135
    %v216 = vunpack.c.l.b16 %v136
    %v217 = vunpack.c.l.b16 %v137
    %v218 = vunpack.c.l.b16 %v138
    %v219 = vunpack.c.l.b16 %v139
    %v220 = vunpack.c.l.b16 %v140
    %v221 = vunpack.c.l.b16 %v141
    %v222 = vunpack.c.l.b16 %v142
    %v223 = vunpack.c.l.b16 %v143
    %v224 = vunpack.c.l.b16 %v144
    %v225 = vunpack.c.l.b16 %v145
    %v226 = vpack.c.b16 %v211, %v210
    %v227 = vpack.c.b16 %v213, %v212
    %v228 = vpack.c.b16 %v215, %v214
    %v229 = vpack.c.b16 %v217, %v216
    %v230 = vpack.c.b16 %v219, %v218
    %v231 = vpack.c.b16 %v221, %v220
    %v232 = vpack.c.b16 %v223, %v222
    %v233 = vpack.c.b16 %v225, %v224
    %242 = vmatprep.subr.bf16.mxu0 0
    %243 = vmatpush1.bf16.msra.mxu0 %v233
    %244 = vmatprep.subr.bf16.mxu0 0
    %245 = vmatpush1.bf16.msra.mxu0 %v232
    %246 = vmatprep.subr.bf16.mxu0 0
    %247 = vmatpush1.bf16.msra.mxu0 %v231
    %248 = vmatprep.subr.bf16.mxu0 0
    %249 = vmatpush1.bf16.msra.mxu0 %v230
    %250 = vmatprep.subr.bf16.mxu0 0
    %251 = vmatpush1.bf16.msra.mxu0 %v229
    %252 = vmatprep.subr.bf16.mxu0 0
    %253 = vmatpush1.bf16.msra.mxu0 %v228
    %254 = vmatprep.subr.bf16.mxu0 0
    %255 = vmatpush1.bf16.msra.mxu0 %v227
    %256 = vmatprep.subr.bf16.mxu0 0
    %257 = vmatpush1.bf16.msra.mxu0 %v226
    %258 = vmatprep.subr.bf16.mxu0 0
    %259 = vmatpush2.bf16.msra.mxu0 0
    %260 = vmatprep.subr.bf16.mxu0 0
    %261 = vmatpush2.bf16.msra.mxu0 0
    %262 = vmatprep.subr.bf16.mxu0 0
    %263 = vmatpush2.bf16.msra.mxu0 0
    %264 = vmatprep.subr.bf16.mxu0 0
    %265 = vmatpush2.bf16.msra.mxu0 0
    %266 = vmatprep.subr.bf16.mxu0 0
    %267 = vmatpush2.bf16.msra.mxu0 0
    %268 = vmatprep.subr.bf16.mxu0 0
    %269 = vmatpush2.bf16.msra.mxu0 0
    %270 = vmatprep.subr.bf16.mxu0 0
    %271 = vmatpush2.bf16.msra.mxu0 0
    %272 = vmatprep.subr.bf16.mxu0 0
    %273 = vmatpush2.bf16.msra.mxu0 0
    %274 = vmatprep.mubr.bf16.mxu0 0
    %275 = vmatmul.mubr.bf16.gmra.mxu0 %v178
    %v276 = vpop.f32.mrf.mxu0
    %v277 = vadd.f32 0.0, %v276
    %v278 = vpop.f32.mrf.mxu0
    %v279 = vpop.f32.mrf.mxu0
    %v280 = vadd.f32 0.0, %v279
    %v281 = vpop.f32.mrf.mxu0
    %282 = vmatprep.mubr.bf16.mxu0 0
    %283 = vmatmul.mubr.bf16.gmra.mxu0 %v179
    %v284 = vpop.f32.mrf.mxu0
    %v285 = vadd.f32 0.0, %v284
    %v286 = vpop.f32.mrf.mxu0
    %v287 = vpop.f32.mrf.mxu0
    %v288 = vadd.f32 0.0, %v287
    %v289 = vpop.f32.mrf.mxu0
    %290 = vmatprep.mubr.bf16.mxu0 0
    %291 = vmatmul.mubr.bf16.gmra.mxu0 %v180
    %v292 = vpop.f32.mrf.mxu0
    %v293 = vadd.f32 0.0, %v292
    %v294 = vpop.f32.mrf.mxu0
    %v295 = vpop.f32.mrf.mxu0
    %v296 = vadd.f32 0.0, %v295
    %v297 = vpop.f32.mrf.mxu0
    %298 = vmatprep.mubr.bf16.mxu0 0
    %299 = vmatmul.mubr.bf16.gmra.mxu0 %v181
    %v300 = vpop.f32.mrf.mxu0
    %v301 = vadd.f32 0.0, %v300
    %v302 = vpop.f32.mrf.mxu0
    %v303 = vpop.f32.mrf.mxu0
    %v304 = vadd.f32 0.0, %v303
    %v305 = vpop.f32.mrf.mxu0
    %306 = vmatprep.mubr.bf16.mxu0 0
    %307 = vmatmul.mubr.bf16.gmra.mxu0 %v182
    %v308 = vpop.f32.mrf.mxu0
    %v309 = vadd.f32 0.0, %v308
    %v310 = vpop.f32.mrf.mxu0
    %v311 = vpop.f32.mrf.mxu0
    %v312 = vadd.f32 0.0, %v311
    %v313 = vpop.f32.mrf.mxu0
    %314 = vmatprep.mubr.bf16.mxu0 0
    %315 = vmatmul.mubr.bf16.gmra.mxu0 %v183
    %v316 = vpop.f32.mrf.mxu0
    %v317 = vadd.f32 0.0, %v316
    %v318 = vpop.f32.mrf.mxu0
    %v319 = vpop.f32.mrf.mxu0
    %v320 = vadd.f32 0.0, %v319
    %v321 = vpop.f32.mrf.mxu0
    %322 = vmatprep.mubr.bf16.mxu0 0
    %323 = vmatmul.mubr.bf16.gmra.mxu0 %v184
    %v324 = vpop.f32.mrf.mxu0
    %v325 = vadd.f32 0.0, %v324
    %v326 = vpop.f32.mrf.mxu0
    %v327 = vpop.f32.mrf.mxu0
    %v328 = vadd.f32 0.0, %v327
    %v329 = vpop.f32.mrf.mxu0
    %330 = vmatprep.mubr.bf16.mxu0 0
    %331 = vmatmul.mubr.bf16.gmra.mxu0 %v185
    %v332 = vpop.f32.mrf.mxu0
    %v333 = vadd.f32 0.0, %v332
    %v334 = vpop.f32.mrf.mxu0
    %v335 = vpop.f32.mrf.mxu0
    %v336 = vadd.f32 0.0, %v335
    %v337 = vpop.f32.mrf.mxu0
    %338 = vdwg.mxu0
    %v339 = vld [vmem:[%s2] sm:$0x1]
    %v340 = vld [vmem:[%s3] sm:$0x1]
    %v341 = vadd.f32 %v277, %v280
    %v342 = vadd.f32 %v341, %v285
    %v343 = vadd.f32 %v342, %v288
    %v344 = vadd.f32 %v343, %v293
    %v345 = vadd.f32 %v344, %v296
    %v346 = vadd.f32 %v345, %v301
    %v347 = vadd.f32 %v346, %v304
    %v348 = vadd.f32 %v347, %v309
    %v349 = vadd.f32 %v348, %v312
    %v350 = vadd.f32 %v349, %v317
    %v351 = vadd.f32 %v350, %v320
    %v352 = vadd.f32 %v351, %v325
    %v353 = vadd.f32 %v352, %v328
    %v354 = vadd.f32 %v353, %v333
    %v355 = vadd.f32 %v354, %v336
    %v356 = vrot.slane %v355, 4
    %v357 = vadd.f32 %v355, %v356
    %v358 = vrot.slane %v357, 2
    %v359 = vadd.f32 %v357, %v358
    %v360 = vrot.slane %v359, 1
    %v361 = vadd.f32 %v359, %v360
    %v362 = vrcp.pop 128.0
    %v363 = vmul.f32 %v361, %v362
    %v364 = vsub.f32 %v277, %v363
    %v365 = vsub.f32 %v280, %v363
    %v366 = vsub.f32 %v285, %v363
    %v367 = vsub.f32 %v288, %v363
    %v368 = vsub.f32 %v293, %v363
    %v369 = vsub.f32 %v296, %v363
    %v370 = vsub.f32 %v301, %v363
    %v371 = vsub.f32 %v304, %v363
    %v372 = vsub.f32 %v309, %v363
    %v373 = vsub.f32 %v312, %v363
    %v374 = vsub.f32 %v317, %v363
    %v375 = vsub.f32 %v320, %v363
    %v376 = vsub.f32 %v325, %v363
    %v377 = vsub.f32 %v328, %v363
    %v378 = vsub.f32 %v333, %v363
    %v379 = vsub.f32 %v336, %v363
    %v380 = vmul.f32 %v364, %v364
    %v381 = vmul.f32 %v365, %v365
    %v382 = vmul.f32 %v366, %v366
    %v383 = vmul.f32 %v367, %v367
    %v384 = vmul.f32 %v368, %v368
    %v385 = vmul.f32 %v369, %v369
    %v386 = vmul.f32 %v370, %v370
    %v387 = vmul.f32 %v371, %v371
    %v388 = vmul.f32 %v372, %v372
    %v389 = vmul.f32 %v373, %v373
    %v390 = vmul.f32 %v374, %v374
    %v391 = vmul.f32 %v375, %v375
    %v392 = vmul.f32 %v376, %v376
    %v393 = vmul.f32 %v377, %v377
    %v394 = vmul.f32 %v378, %v378
    %v395 = vmul.f32 %v379, %v379
    %v396 = vadd.f32 %v380, %v381
    %v397 = vadd.f32 %v396, %v382
    %v398 = vadd.f32 %v397, %v383
    %v399 = vadd.f32 %v398, %v384
    %v400 = vadd.f32 %v399, %v385
    %v401 = vadd.f32 %v400, %v386
    %v402 = vadd.f32 %v401, %v387
    %v403 = vadd.f32 %v402, %v388
    %v404 = vadd.f32 %v403, %v389
    %v405 = vadd.f32 %v404, %v390
    %v406 = vadd.f32 %v405, %v391
    %v407 = vadd.f32 %v406, %v392
    %v408 = vadd.f32 %v407, %v393
    %v409 = vadd.f32 %v408, %v394
    %v410 = vadd.f32 %v409, %v395
    %v411 = vrot.slane %v410, 4
    %v412 = vadd.f32 %v410, %v411
    %v413 = vrot.slane %v412, 2
    %v414 = vadd.f32 %v412, %v413
    %v415 = vrot.slane %v414, 1
    %v416 = vadd.f32 %v414, %v415
    %v417 = vmul.f32 %v416, %v362
    %v418 = vadd.f32 %v417, 1e-05
    %v419 = vrsqrt.pop %v418
    %v420 = vmul.f32 %v339, %v419
    %v422 = vlaneseq
    %v423 = vshrl.u32 %v422, 7
    %v424 = vsub.s32 0, %v423
    %v425 = vrot.slane %v420, %v424
    %v427 = vmul.f32 %v364, %v425
    %v428 = vmul.f32 %v365, %v425
    %v429 = vmul.f32 %v366, %v425
    %v430 = vmul.f32 %v367, %v425
    %v431 = vmul.f32 %v368, %v425
    %v432 = vmul.f32 %v369, %v425
    %v433 = vmul.f32 %v370, %v425
    %v434 = vmul.f32 %v371, %v425
    %v435 = vmul.f32 %v372, %v425
    %v436 = vmul.f32 %v373, %v425
    %v437 = vmul.f32 %v374, %v425
    %v438 = vmul.f32 %v375, %v425
    %v439 = vmul.f32 %v376, %v425
    %v440 = vmul.f32 %v377, %v425
    %v441 = vmul.f32 %v378, %v425
    %v442 = vmul.f32 %v379, %v425
    %v444 = vlaneseq
    %v445 = vshrl.u32 %v444, 7
    %v446 = vsub.s32 0, %v445
    %v447 = vrot.slane %v340, %v446
    %v449 = vadd.f32 %v427, %v447
    %v450 = vadd.f32 %v428, %v447
    %v451 = vadd.f32 %v429, %v447
    %v452 = vadd.f32 %v430, %v447
    %v453 = vadd.f32 %v431, %v447
    %v454 = vadd.f32 %v432, %v447
    %v455 = vadd.f32 %v433, %v447
    %v456 = vadd.f32 %v434, %v447
    %v457 = vadd.f32 %v435, %v447
    %v458 = vadd.f32 %v436, %v447
    %v459 = vadd.f32 %v437, %v447
    %v460 = vadd.f32 %v438, %v447
    %v461 = vadd.f32 %v439, %v447
    %v462 = vadd.f32 %v440, %v447
    %v463 = vadd.f32 %v441, %v447
    %v464 = vadd.f32 %v442, %v447
    %v465 = vmax.f32 %v449, 0.0
    %v466 = vmax.f32 %v450, 0.0
    %v467 = vmax.f32 %v451, 0.0
    %v468 = vmax.f32 %v452, 0.0
    %v469 = vmax.f32 %v453, 0.0
    %v470 = vmax.f32 %v454, 0.0
    %v471 = vmax.f32 %v455, 0.0
    %v472 = vmax.f32 %v456, 0.0
    %v473 = vmax.f32 %v457, 0.0
    %v474 = vmax.f32 %v458, 0.0
    %v475 = vmax.f32 %v459, 0.0
    %v476 = vmax.f32 %v460, 0.0
    %v477 = vmax.f32 %v461, 0.0
    %v478 = vmax.f32 %v462, 0.0
    %v479 = vmax.f32 %v463, 0.0
    %v480 = vmax.f32 %v464, 0.0
    %s481 = scalar_lea.vmem [#allocation2], 16
    %482 = vst [vmem:[%s481 + $0x1] sm:$0xff] %v465
    %483 = vst [vmem:[%s481 + $0x11] sm:$0xff] %v466
    %484 = vst [vmem:[%s481 + $0x21] sm:$0xff] %v467
    %485 = vst [vmem:[%s481 + $0x31] sm:$0xff] %v468
    %486 = vst [vmem:[%s481 + $0x41] sm:$0xff] %v469
    %487 = vst [vmem:[%s481 + $0x51] sm:$0xff] %v470
    %488 = vst [vmem:[%s481 + $0x61] sm:$0xff] %v471
    %489 = vst [vmem:[%s481 + $0x71] sm:$0xff] %v472
    %490 = vst [vmem:[%s481 + $0xa1] sm:$0xff] %v473
    %491 = vst [vmem:[%s481 + $0xb1] sm:$0xff] %v474
    %492 = vst [vmem:[%s481 + $0xc1] sm:$0xff] %v475
    %493 = vst [vmem:[%s481 + $0xd1] sm:$0xff] %v476
    %494 = vst [vmem:[%s481 + $0xe1] sm:$0xff] %v477
    %495 = vst [vmem:[%s481 + $0xf1] sm:$0xff] %v478
    %496 = vst [vmem:[%s481 + $0x101] sm:$0xff] %v479
    %497 = vst [vmem:[%s481 + $0x111] sm:$0xff] %v480
    %498 = vst [vmem:[#allocation2] sm:$0xff] 0.0
    %499 = vst [vmem:[#allocation2 + $0x8] sm:$0x3] 0.0
    %500 = vst [vmem:[#allocation2 + $0xa0] sm:$0xff] 0.0
    %501 = vst [vmem:[#allocation2 + $0xa8] sm:$0x3] 0.0
    %s502 = scalar_lea.vmem [#allocation2], 144
    %503 = vst [vmem:[%s502] sm:$0xff] 0.0
    %504 = vst [vmem:[%s502 + $0x8] sm:$0x3] 0.0
    %505 = vst [vmem:[%s502 + $0xa0] sm:$0xff] 0.0
    %506 = vst [vmem:[%s502 + $0xa8] sm:$0x3] 0.0
    %507 = vst [vmem:[%s481] sm:$0x1] 0.0
    %508 = vst [vmem:[%s481 + $0x10] sm:$0x1] 0.0
    %509 = vst [vmem:[%s481 + $0x20] sm:$0x1] 0.0
    %510 = vst [vmem:[%s481 + $0x30] sm:$0x1] 0.0
    %511 = vst [vmem:[%s481 + $0x40] sm:$0x1] 0.0
    %512 = vst [vmem:[%s481 + $0x50] sm:$0x1] 0.0
    %513 = vst [vmem:[%s481 + $0x60] sm:$0x1] 0.0
    %514 = vst [vmem:[%s481 + $0x70] sm:$0x1] 0.0
    %515 = vst [vmem:[%s481 + $0xa0] sm:$0x1] 0.0
    %516 = vst [vmem:[%s481 + $0xb0] sm:$0x1] 0.0
    %517 = vst [vmem:[%s481 + $0xc0] sm:$0x1] 0.0
    %518 = vst [vmem:[%s481 + $0xd0] sm:$0x1] 0.0
    %519 = vst [vmem:[%s481 + $0xe0] sm:$0x1] 0.0
    %520 = vst [vmem:[%s481 + $0xf0] sm:$0x1] 0.0
    %521 = vst [vmem:[%s481 + $0x100] sm:$0x1] 0.0
    %522 = vst [vmem:[%s481 + $0x110] sm:$0x1] 0.0
    %523 = vst [vmem:[%s481 + $0x9] sm:$0x1] 0.0
    %524 = vst [vmem:[%s481 + $0x19] sm:$0x1] 0.0
    %525 = vst [vmem:[%s481 + $0x29] sm:$0x1] 0.0
    %526 = vst [vmem:[%s481 + $0x39] sm:$0x1] 0.0
    %527 = vst [vmem:[%s481 + $0x49] sm:$0x1] 0.0
    %528 = vst [vmem:[%s481 + $0x59] sm:$0x1] 0.0
    %529 = vst [vmem:[%s481 + $0x69] sm:$0x1] 0.0
    %530 = vst [vmem:[%s481 + $0x79] sm:$0x1] 0.0
    %531 = vst [vmem:[%s481 + $0xa9] sm:$0x1] 0.0
    %532 = vst [vmem:[%s481 + $0xb9] sm:$0x1] 0.0
    %533 = vst [vmem:[%s481 + $0xc9] sm:$0x1] 0.0
    %534 = vst [vmem:[%s481 + $0xd9] sm:$0x1] 0.0
    %535 = vst [vmem:[%s481 + $0xe9] sm:$0x1] 0.0
    %536 = vst [vmem:[%s481 + $0xf9] sm:$0x1] 0.0
    %537 = vst [vmem:[%s481 + $0x109] sm:$0x1] 0.0
    %538 = vst [vmem:[%s481 + $0x119] sm:$0x1] 0.0
    %v539 = vld [vmem:[#allocation2] sm:$0xff]
    %v540 = vld [vmem:[#allocation2 + $0x10] sm:$0xff]
    %v541 = vld [vmem:[#allocation2 + $0x20] sm:$0xff]
    %v542 = vld [vmem:[#allocation2 + $0x30] sm:$0xff]
    %v543 = vld [vmem:[#allocation2 + $0x40] sm:$0xff]
    %v544 = vld [vmem:[#allocation2 + $0x50] sm:$0xff]
    %v545 = vld [vmem:[#allocation2 + $0x60] sm:$0xff]
    %v546 = vld [vmem:[#allocation2 + $0x70] sm:$0xff]
    %v547 = vld [vmem:[#allocation2 + $0xa0] sm:$0xff]
    %v548 = vld [vmem:[#allocation2 + $0xb0] sm:$0xff]
    %v549 = vld [vmem:[#allocation2 + $0xc0] sm:$0xff]
    %v550 = vld [vmem:[#allocation2 + $0xd0] sm:$0xff]
    %v551 = vld [vmem:[#allocation2 + $0xe0] sm:$0xff]
    %v552 = vld [vmem:[#allocation2 + $0xf0] sm:$0xff]
    %v553 = vld [vmem:[#allocation2 + $0x100] sm:$0xff]
    %v554 = vld [vmem:[#allocation2 + $0x110] sm:$0xff]
    %v555 = vld [vmem:[#allocation2 + $0x1] sm:$0xff]
    %v556 = vld [vmem:[#allocation2 + $0x11] sm:$0xff]
    %v557 = vld [vmem:[#allocation2 + $0x21] sm:$0xff]
    %v558 = vld [vmem:[#allocation2 + $0x31] sm:$0xff]
    %v559 = vld [vmem:[#allocation2 + $0x41] sm:$0xff]
    %v560 = vld [vmem:[#allocation2 + $0x51] sm:$0xff]
    %v561 = vld [vmem:[#allocation2 + $0x61] sm:$0xff]
    %v562 = vld [vmem:[#allocation2 + $0x71] sm:$0xff]
    %v563 = vld [vmem:[#allocation2 + $0xa1] sm:$0xff]
    %v564 = vld [vmem:[#allocation2 + $0xb1] sm:$0xff]
    %v565 = vld [vmem:[#allocation2 + $0xc1] sm:$0xff]
    %v566 = vld [vmem:[#allocation2 + $0xd1] sm:$0xff]
    %v567 = vld [vmem:[#allocation2 + $0xe1] sm:$0xff]
    %v568 = vld [vmem:[#allocation2 + $0xf1] sm:$0xff]
    %v569 = vld [vmem:[#allocation2 + $0x101] sm:$0xff]
    %v570 = vld [vmem:[#allocation2 + $0x111] sm:$0xff]
    %v571 = vld [vmem:[#allocation2 + $0x2] sm:$0xff]
    %v572 = vld [vmem:[#allocation2 + $0x12] sm:$0xff]
    %v573 = vld [vmem:[#allocation2 + $0x22] sm:$0xff]
    %v574 = vld [vmem:[#allocation2 + $0x32] sm:$0xff]
    %v575 = vld [vmem:[#allocation2 + $0x42] sm:$0xff]
    %v576 = vld [vmem:[#allocation2 + $0x52] sm:$0xff]
    %v577 = vld [vmem:[#allocation2 + $0x62] sm:$0xff]
    %v578 = vld [vmem:[#allocation2 + $0x72] sm:$0xff]
    %v579 = vld [vmem:[#allocation2 + $0xa2] sm:$0xff]
    %v580 = vld [vmem:[#allocation2 + $0xb2] sm:$0xff]
    %v581 = vld [vmem:[#allocation2 + $0xc2] sm:$0xff]
    %v582 = vld [vmem:[#allocation2 + $0xd2] sm:$0xff]
    %v583 = vld [vmem:[#allocation2 + $0xe2] sm:$0xff]
    %v584 = vld [vmem:[#allocation2 + $0xf2] sm:$0xff]
    %v585 = vld [vmem:[#allocation2 + $0x102] sm:$0xff]
    %v586 = vld [vmem:[#allocation2 + $0x112] sm:$0xff]
    %v587 = vld [vmem:[%s481] sm:$0xff]
    %v588 = vld [vmem:[%s481 + $0x10] sm:$0xff]
    %v589 = vld [vmem:[%s481 + $0x20] sm:$0xff]
    %v590 = vld [vmem:[%s481 + $0x30] sm:$0xff]
    %v591 = vld [vmem:[%s481 + $0x40] sm:$0xff]
    %v592 = vld [vmem:[%s481 + $0x50] sm:$0xff]
    %v593 = vld [vmem:[%s481 + $0x60] sm:$0xff]
    %v594 = vld [vmem:[%s481 + $0x70] sm:$0xff]
    %v595 = vld [vmem:[%s481 + $0xa0] sm:$0xff]
    %v596 = vld [vmem:[%s481 + $0xb0] sm:$0xff]
    %v597 = vld [vmem:[%s481 + $0xc0] sm:$0xff]
    %v598 = vld [vmem:[%s481 + $0xd0] sm:$0xff]
    %v599 = vld [vmem:[%s481 + $0xe0] sm:$0xff]
    %v600 = vld [vmem:[%s481 + $0xf0] sm:$0xff]
    %v601 = vld [vmem:[%s481 + $0x100] sm:$0xff]
    %v602 = vld [vmem:[%s481 + $0x110] sm:$0xff]
    %v603 = vld [vmem:[%s481 + $0x1] sm:$0xff]
    %v604 = vld [vmem:[%s481 + $0x11] sm:$0xff]
    %v605 = vld [vmem:[%s481 + $0x21] sm:$0xff]
    %v606 = vld [vmem:[%s481 + $0x31] sm:$0xff]
    %v607 = vld [vmem:[%s481 + $0x41] sm:$0xff]
    %v608 = vld [vmem:[%s481 + $0x51] sm:$0xff]
    %v609 = vld [vmem:[%s481 + $0x61] sm:$0xff]
    %v610 = vld [vmem:[%s481 + $0x71] sm:$0xff]
    %v611 = vld [vmem:[%s481 + $0xa1] sm:$0xff]
    %v612 = vld [vmem:[%s481 + $0xb1] sm:$0xff]
    %v613 = vld [vmem:[%s481 + $0xc1] sm:$0xff]
    %v614 = vld [vmem:[%s481 + $0xd1] sm:$0xff]
    %v615 = vld [vmem:[%s481 + $0xe1] sm:$0xff]
    %v616 = vld [vmem:[%s481 + $0xf1] sm:$0xff]
    %v617 = vld [vmem:[%s481 + $0x101] sm:$0xff]
    %v618 = vld [vmem:[%s481 + $0x111] sm:$0xff]
    %v619 = vld [vmem:[%s481 + $0x2] sm:$0xff]
    %v620 = vld [vmem:[%s481 + $0x12] sm:$0xff]
    %v621 = vld [vmem:[%s481 + $0x22] sm:$0xff]
    %v622 = vld [vmem:[%s481 + $0x32] sm:$0xff]
    %v623 = vld [vmem:[%s481 + $0x42] sm:$0xff]
    %v624 = vld [vmem:[%s481 + $0x52] sm:$0xff]
    %v625 = vld [vmem:[%s481 + $0x62] sm:$0xff]
    %v626 = vld [vmem:[%s481 + $0x72] sm:$0xff]
    %v627 = vld [vmem:[%s481 + $0xa2] sm:$0xff]
    %v628 = vld [vmem:[%s481 + $0xb2] sm:$0xff]
    %v629 = vld [vmem:[%s481 + $0xc2] sm:$0xff]
    %v630 = vld [vmem:[%s481 + $0xd2] sm:$0xff]
    %v631 = vld [vmem:[%s481 + $0xe2] sm:$0xff]
    %v632 = vld [vmem:[%s481 + $0xf2] sm:$0xff]
    %v633 = vld [vmem:[%s481 + $0x102] sm:$0xff]
    %v634 = vld [vmem:[%s481 + $0x112] sm:$0xff]
    %s635 = scalar_lea.vmem [#allocation2], 32
    %v636 = vld [vmem:[%s635] sm:$0xff]
    %v637 = vld [vmem:[%s635 + $0x10] sm:$0xff]
    %v638 = vld [vmem:[%s635 + $0x20] sm:$0xff]
    %v639 = vld [vmem:[%s635 + $0x30] sm:$0xff]
    %v640 = vld [vmem:[%s635 + $0x40] sm:$0xff]
    %v641 = vld [vmem:[%s635 + $0x50] sm:$0xff]
    %v642 = vld [vmem:[%s635 + $0x60] sm:$0xff]
    %v643 = vld [vmem:[%s635 + $0x70] sm:$0xff]
    %v644 = vld [vmem:[%s635 + $0xa0] sm:$0xff]
    %v645 = vld [vmem:[%s635 + $0xb0] sm:$0xff]
    %v646 = vld [vmem:[%s635 + $0xc0] sm:$0xff]
    %v647 = vld [vmem:[%s635 + $0xd0] sm:$0xff]
    %v648 = vld [vmem:[%s635 + $0xe0] sm:$0xff]
    %v649 = vld [vmem:[%s635 + $0xf0] sm:$0xff]
    %v650 = vld [vmem:[%s635 + $0x100] sm:$0xff]
    %v651 = vld [vmem:[%s635 + $0x110] sm:$0xff]
    %v652 = vld [vmem:[%s635 + $0x1] sm:$0xff]
    %v653 = vld [vmem:[%s635 + $0x11] sm:$0xff]
    %v654 = vld [vmem:[%s635 + $0x21] sm:$0xff]
    %v655 = vld [vmem:[%s635 + $0x31] sm:$0xff]
    %v656 = vld [vmem:[%s635 + $0x41] sm:$0xff]
    %v657 = vld [vmem:[%s635 + $0x51] sm:$0xff]
    %v658 = vld [vmem:[%s635 + $0x61] sm:$0xff]
    %v659 = vld [vmem:[%s635 + $0x71] sm:$0xff]
    %v660 = vld [vmem:[%s635 + $0xa1] sm:$0xff]
    %v661 = vld [vmem:[%s635 + $0xb1] sm:$0xff]
    %v662 = vld [vmem:[%s635 + $0xc1] sm:$0xff]
    %v663 = vld [vmem:[%s635 + $0xd1] sm:$0xff]
    %v664 = vld [vmem:[%s635 + $0xe1] sm:$0xff]
    %v665 = vld [vmem:[%s635 + $0xf1] sm:$0xff]
    %v666 = vld [vmem:[%s635 + $0x101] sm:$0xff]
    %v667 = vld [vmem:[%s635 + $0x111] sm:$0xff]
    %v668 = vld [vmem:[%s635 + $0x2] sm:$0xff]
    %v669 = vld [vmem:[%s635 + $0x12] sm:$0xff]
    %v670 = vld [vmem:[%s635 + $0x22] sm:$0xff]
    %v671 = vld [vmem:[%s635 + $0x32] sm:$0xff]
    %v672 = vld [vmem:[%s635 + $0x42] sm:$0xff]
    %v673 = vld [vmem:[%s635 + $0x52] sm:$0xff]
    %v674 = vld [vmem:[%s635 + $0x62] sm:$0xff]
    %v675 = vld [vmem:[%s635 + $0x72] sm:$0xff]
    %v676 = vld [vmem:[%s635 + $0xa2] sm:$0xff]
    %v677 = vld [vmem:[%s635 + $0xb2] sm:$0xff]
    %v678 = vld [vmem:[%s635 + $0xc2] sm:$0xff]
    %v679 = vld [vmem:[%s635 + $0xd2] sm:$0xff]
    %v680 = vld [vmem:[%s635 + $0xe2] sm:$0xff]
    %v681 = vld [vmem:[%s635 + $0xf2] sm:$0xff]
    %v682 = vld [vmem:[%s635 + $0x102] sm:$0xff]
    %v683 = vld [vmem:[%s635 + $0x112] sm:$0xff]
    %v684 = vpack.c.bf16 %v540, %v539
    %v685 = vpack.c.bf16 %v556, %v555
    %v686 = vpack.c.bf16 %v572, %v571
    %v687 = vpack.c.bf16 %v588, %v587
    %v688 = vpack.c.bf16 %v604, %v603
    %v689 = vpack.c.bf16 %v620, %v619
    %v690 = vpack.c.bf16 %v637, %v636
    %v691 = vpack.c.bf16 %v653, %v652
    %v692 = vpack.c.bf16 %v669, %v668
    %v693 = vpack.c.bf16 %v542, %v541
    %v694 = vpack.c.bf16 %v558, %v557
    %v695 = vpack.c.bf16 %v574, %v573
    %v696 = vpack.c.bf16 %v590, %v589
    %v697 = vpack.c.bf16 %v606, %v605
    %v698 = vpack.c.bf16 %v622, %v621
    %v699 = vpack.c.bf16 %v639, %v638
    %v700 = vpack.c.bf16 %v655, %v654
    %v701 = vpack.c.bf16 %v671, %v670
    %v702 = vpack.c.bf16 %v544, %v543
    %v703 = vpack.c.bf16 %v560, %v559
    %v704 = vpack.c.bf16 %v576, %v575
    %v705 = vpack.c.bf16 %v592, %v591
    %v706 = vpack.c.bf16 %v608, %v607
    %v707 = vpack.c.bf16 %v624, %v623
    %v708 = vpack.c.bf16 %v641, %v640
    %v709 = vpack.c.bf16 %v657, %v656
    %v710 = vpack.c.bf16 %v673, %v672
    %v711 = vpack.c.bf16 %v546, %v545
    %v712 = vpack.c.bf16 %v562, %v561
    %v713 = vpack.c.bf16 %v578, %v577
    %v714 = vpack.c.bf16 %v594, %v593
    %v715 = vpack.c.bf16 %v610, %v609
    %v716 = vpack.c.bf16 %v626, %v625
    %v717 = vpack.c.bf16 %v643, %v642
    %v718 = vpack.c.bf16 %v659, %v658
    %v719 = vpack.c.bf16 %v675, %v674
    %v720 = vpack.c.bf16 %v548, %v547
    %v721 = vpack.c.bf16 %v564, %v563
    %v722 = vpack.c.bf16 %v580, %v579
    %v723 = vpack.c.bf16 %v596, %v595
    %v724 = vpack.c.bf16 %v612, %v611
    %v725 = vpack.c.bf16 %v628, %v627
    %v726 = vpack.c.bf16 %v645, %v644
    %v727 = vpack.c.bf16 %v661, %v660
    %v728 = vpack.c.bf16 %v677, %v676
    %v729 = vpack.c.bf16 %v550, %v549
    %v730 = vpack.c.bf16 %v566, %v565
    %v731 = vpack.c.bf16 %v582, %v581
    %v732 = vpack.c.bf16 %v598, %v597
    %v733 = vpack.c.bf16 %v614, %v613
    %v734 = vpack.c.bf16 %v630, %v629
    %v735 = vpack.c.bf16 %v647, %v646
    %v736 = vpack.c.bf16 %v663, %v662
    %v737 = vpack.c.bf16 %v679, %v678
    %v738 = vpack.c.bf16 %v552, %v551
    %v739 = vpack.c.bf16 %v568, %v567
    %v740 = vpack.c.bf16 %v584, %v583
    %v741 = vpack.c.bf16 %v600, %v599
    %v742 = vpack.c.bf16 %v616, %v615
    %v743 = vpack.c.bf16 %v632, %v631
    %v744 = vpack.c.bf16 %v649, %v648
    %v745 = vpack.c.bf16 %v665, %v664
    %v746 = vpack.c.bf16 %v681, %v680
    %v747 = vpack.c.bf16 %v554, %v553
    %v748 = vpack.c.bf16 %v570, %v569
    %v749 = vpack.c.bf16 %v586, %v585
    %v750 = vpack.c.bf16 %v602, %v601
    %v751 = vpack.c.bf16 %v618, %v617
    %v752 = vpack.c.bf16 %v634, %v633
    %v753 = vpack.c.bf16 %v651, %v650
    %v754 = vpack.c.bf16 %v667, %v666
    %v755 = vpack.c.bf16 %v683, %v682
    %v756 = vld [vmem:[#allocation8] sm:$0xf]
    %v757 = vld [vmem:[#allocation8 + $0x4] sm:$0xf]
    %v758 = vld [vmem:[#allocation8 + $0x8] sm:$0xf]
    %v759 = vld [vmem:[#allocation8 + $0xc] sm:$0xf]
    %v760 = vld [vmem:[#allocation8 + $0x10] sm:$0xf]
    %v761 = vld [vmem:[#allocation8 + $0x14] sm:$0xf]
    %v762 = vld [vmem:[#allocation8 + $0x18] sm:$0xf]
    %v763 = vld [vmem:[#allocation8 + $0x1c] sm:$0xf]
    %v764 = vld [vmem:[#allocation8 + $0x20] sm:$0xf]
    %v765 = vld [vmem:[#allocation8 + $0x24] sm:$0xf]
    %v766 = vld [vmem:[#allocation8 + $0x28] sm:$0xf]
    %v767 = vld [vmem:[#allocation8 + $0x2c] sm:$0xf]
    %v768 = vld [vmem:[#allocation8 + $0x30] sm:$0xf]
    %v769 = vld [vmem:[#allocation8 + $0x34] sm:$0xf]
    %v770 = vld [vmem:[#allocation8 + $0x38] sm:$0xf]
    %v771 = vld [vmem:[#allocation8 + $0x3c] sm:$0xf]
    %v772 = vld [vmem:[#allocation8 + $0x40] sm:$0xf]
    %v773 = vld [vmem:[#allocation8 + $0x44] sm:$0xf]
    %v774 = vld [vmem:[#allocation8 + $0x48] sm:$0xf]
    %v775 = vld [vmem:[#allocation8 + $0x4c] sm:$0xf]
    %v776 = vld [vmem:[#allocation8 + $0x50] sm:$0xf]
    %v777 = vld [vmem:[#allocation8 + $0x54] sm:$0xf]
    %v778 = vld [vmem:[#allocation8 + $0x58] sm:$0xf]
    %v779 = vld [vmem:[#allocation8 + $0x5c] sm:$0xf]
    %v780 = vld [vmem:[#allocation8 + $0x60] sm:$0xf]
    %v781 = vld [vmem:[#allocation8 + $0x64] sm:$0xf]
    %v782 = vld [vmem:[#allocation8 + $0x68] sm:$0xf]
    %v783 = vld [vmem:[#allocation8 + $0x6c] sm:$0xf]
    %v784 = vld [vmem:[#allocation8 + $0x70] sm:$0xf]
    %v785 = vld [vmem:[#allocation8 + $0x74] sm:$0xf]
    %v786 = vld [vmem:[#allocation8 + $0x78] sm:$0xf]
    %v787 = vld [vmem:[#allocation8 + $0x7c] sm:$0xf]
    %v788 = vld [vmem:[#allocation8 + $0x80] sm:$0xf]
    %v789 = vld [vmem:[#allocation8 + $0x84] sm:$0xf]
    %v790 = vld [vmem:[#allocation8 + $0x88] sm:$0xf]
    %v791 = vld [vmem:[#allocation8 + $0x8c] sm:$0xf]
    %v792 = vld [vmem:[#allocation8 + $0x90] sm:$0xf]
    %v793 = vld [vmem:[#allocation8 + $0x94] sm:$0xf]
    %v794 = vld [vmem:[#allocation8 + $0x98] sm:$0xf]
    %v795 = vld [vmem:[#allocation8 + $0x9c] sm:$0xf]
    %v796 = vld [vmem:[#allocation8 + $0xa0] sm:$0xf]
    %v797 = vld [vmem:[#allocation8 + $0xa4] sm:$0xf]
    %v798 = vld [vmem:[#allocation8 + $0xa8] sm:$0xf]
    %v799 = vld [vmem:[#allocation8 + $0xac] sm:$0xf]
    %v800 = vld [vmem:[#allocation8 + $0xb0] sm:$0xf]
    %v801 = vld [vmem:[#allocation8 + $0xb4] sm:$0xf]
    %v802 = vld [vmem:[#allocation8 + $0xb8] sm:$0xf]
    %v803 = vld [vmem:[#allocation8 + $0xbc] sm:$0xf]
    %v804 = vld [vmem:[#allocation8 + $0xc0] sm:$0xf]
    %v805 = vld [vmem:[#allocation8 + $0xc4] sm:$0xf]
    %v806 = vld [vmem:[#allocation8 + $0xc8] sm:$0xf]
    %v807 = vld [vmem:[#allocation8 + $0xcc] sm:$0xf]
    %v808 = vld [vmem:[#allocation8 + $0xd0] sm:$0xf]
    %v809 = vld [vmem:[#allocation8 + $0xd4] sm:$0xf]
    %v810 = vld [vmem:[#allocation8 + $0xd8] sm:$0xf]
    %v811 = vld [vmem:[#allocation8 + $0xdc] sm:$0xf]
    %v812 = vld [vmem:[#allocation8 + $0xe0] sm:$0xf]
    %v813 = vld [vmem:[#allocation8 + $0xe4] sm:$0xf]
    %v814 = vld [vmem:[#allocation8 + $0xe8] sm:$0xf]
    %v815 = vld [vmem:[#allocation8 + $0xec] sm:$0xf]
    %v816 = vld [vmem:[#allocation8 + $0xf0] sm:$0xf]
    %v817 = vld [vmem:[#allocation8 + $0xf4] sm:$0xf]
    %v818 = vld [vmem:[#allocation8 + $0xf8] sm:$0xf]
    %v819 = vld [vmem:[#allocation8 + $0xfc] sm:$0xf]
    %v820 = vld [vmem:[#allocation8 + $0x100] sm:$0xf]
    %v821 = vld [vmem:[#allocation8 + $0x104] sm:$0xf]
    %v822 = vld [vmem:[#allocation8 + $0x108] sm:$0xf]
    %v823 = vld [vmem:[#allocation8 + $0x10c] sm:$0xf]
    %v824 = vld [vmem:[#allocation8 + $0x110] sm:$0xf]
    %v825 = vld [vmem:[#allocation8 + $0x114] sm:$0xf]
    %v826 = vld [vmem:[#allocation8 + $0x118] sm:$0xf]
    %v827 = vld [vmem:[#allocation8 + $0x11c] sm:$0xf]
    %v828 = vld [vmem:[#allocation8 + $0x120] sm:$0xf]
    %v829 = vld [vmem:[#allocation8 + $0x124] sm:$0xf]
    %v830 = vld [vmem:[#allocation8 + $0x128] sm:$0xf]
    %v831 = vld [vmem:[#allocation8 + $0x12c] sm:$0xf]
    %v832 = vld [vmem:[#allocation8 + $0x130] sm:$0xf]
    %v833 = vld [vmem:[#allocation8 + $0x134] sm:$0xf]
    %v834 = vld [vmem:[#allocation8 + $0x138] sm:$0xf]
    %v835 = vld [vmem:[#allocation8 + $0x13c] sm:$0xf]
    %v836 = vld [vmem:[#allocation8 + $0x140] sm:$0xf]
    %v837 = vld [vmem:[#allocation8 + $0x144] sm:$0xf]
    %v838 = vld [vmem:[#allocation8 + $0x148] sm:$0xf]
    %v839 = vld [vmem:[#allocation8 + $0x14c] sm:$0xf]
    %v840 = vld [vmem:[#allocation8 + $0x150] sm:$0xf]
    %v841 = vld [vmem:[#allocation8 + $0x154] sm:$0xf]
    %v842 = vld [vmem:[#allocation8 + $0x158] sm:$0xf]
    %v843 = vld [vmem:[#allocation8 + $0x15c] sm:$0xf]
    %v844 = vld [vmem:[#allocation8 + $0x160] sm:$0xf]
    %v845 = vld [vmem:[#allocation8 + $0x164] sm:$0xf]
    %v846 = vld [vmem:[#allocation8 + $0x168] sm:$0xf]
    %v847 = vld [vmem:[#allocation8 + $0x16c] sm:$0xf]
    %v848 = vld [vmem:[#allocation8 + $0x170] sm:$0xf]
    %v849 = vld [vmem:[#allocation8 + $0x174] sm:$0xf]
    %v850 = vld [vmem:[#allocation8 + $0x178] sm:$0xf]
    %v851 = vld [vmem:[#allocation8 + $0x17c] sm:$0xf]
    %v852 = vld [vmem:[#allocation8 + $0x180] sm:$0xf]
    %v853 = vld [vmem:[#allocation8 + $0x184] sm:$0xf]
    %v854 = vld [vmem:[#allocation8 + $0x188] sm:$0xf]
    %v855 = vld [vmem:[#allocation8 + $0x18c] sm:$0xf]
    %v856 = vld [vmem:[#allocation8 + $0x190] sm:$0xf]
    %v857 = vld [vmem:[#allocation8 + $0x194] sm:$0xf]
    %v858 = vld [vmem:[#allocation8 + $0x198] sm:$0xf]
    %v859 = vld [vmem:[#allocation8 + $0x19c] sm:$0xf]
    %v860 = vld [vmem:[#allocation8 + $0x1a0] sm:$0xf]
    %v861 = vld [vmem:[#allocation8 + $0x1a4] sm:$0xf]
    %v862 = vld [vmem:[#allocation8 + $0x1a8] sm:$0xf]
    %v863 = vld [vmem:[#allocation8 + $0x1ac] sm:$0xf]
    %v864 = vld [vmem:[#allocation8 + $0x1b0] sm:$0xf]
    %v865 = vld [vmem:[#allocation8 + $0x1b4] sm:$0xf]
    %v866 = vld [vmem:[#allocation8 + $0x1b8] sm:$0xf]
    %v867 = vld [vmem:[#allocation8 + $0x1bc] sm:$0xf]
    %v868 = vld [vmem:[#allocation8 + $0x1c0] sm:$0xf]
    %v869 = vld [vmem:[#allocation8 + $0x1c4] sm:$0xf]
    %v870 = vld [vmem:[#allocation8 + $0x1c8] sm:$0xf]
    %v871 = vld [vmem:[#allocation8 + $0x1cc] sm:$0xf]
    %v872 = vld [vmem:[#allocation8 + $0x1d0] sm:$0xf]
    %v873 = vld [vmem:[#allocation8 + $0x1d4] sm:$0xf]
    %v874 = vld [vmem:[#allocation8 + $0x1d8] sm:$0xf]
    %v875 = vld [vmem:[#allocation8 + $0x1dc] sm:$0xf]
    %v876 = vld [vmem:[#allocation8 + $0x1e0] sm:$0xf]
    %v877 = vld [vmem:[#allocation8 + $0x1e4] sm:$0xf]
    %v878 = vld [vmem:[#allocation8 + $0x1e8] sm:$0xf]
    %v879 = vld [vmem:[#allocation8 + $0x1ec] sm:$0xf]
    %v880 = vld [vmem:[#allocation8 + $0x1f0] sm:$0xf]
    %v881 = vld [vmem:[#allocation8 + $0x1f4] sm:$0xf]
    %v882 = vld [vmem:[#allocation8 + $0x1f8] sm:$0xf]
    %v883 = vld [vmem:[#allocation8 + $0x1fc] sm:$0xf]
    %v884 = vld [vmem:[#allocation8 + $0x200] sm:$0xf]
    %v885 = vld [vmem:[#allocation8 + $0x204] sm:$0xf]
    %v886 = vld [vmem:[#allocation8 + $0x208] sm:$0xf]
    %v887 = vld [vmem:[#allocation8 + $0x20c] sm:$0xf]
    %v888 = vld [vmem:[#allocation8 + $0x210] sm:$0xf]
    %v889 = vld [vmem:[#allocation8 + $0x214] sm:$0xf]
    %v890 = vld [vmem:[#allocation8 + $0x218] sm:$0xf]
    %v891 = vld [vmem:[#allocation8 + $0x21c] sm:$0xf]
    %v892 = vld [vmem:[#allocation8 + $0x220] sm:$0xf]
    %v893 = vld [vmem:[#allocation8 + $0x224] sm:$0xf]
    %v894 = vld [vmem:[#allocation8 + $0x228] sm:$0xf]
    %v895 = vld [vmem:[#allocation8 + $0x22c] sm:$0xf]
    %v896 = vld [vmem:[#allocation8 + $0x230] sm:$0xf]
    %v897 = vld [vmem:[#allocation8 + $0x234] sm:$0xf]
    %v898 = vld [vmem:[#allocation8 + $0x238] sm:$0xf]
    %v899 = vld [vmem:[#allocation8 + $0x23c] sm:$0xf]
    %v1044 = vunpack.c.l.b16 %v756
    %v1045 = vunpack.c.l.b16 %v757
    %v1046 = vunpack.c.l.b16 %v758
    %v1047 = vunpack.c.l.b16 %v759
    %v1048 = vunpack.c.l.b16 %v760
    %v1049 = vunpack.c.l.b16 %v761
    %v1050 = vunpack.c.l.b16 %v762
    %v1051 = vunpack.c.l.b16 %v763
    %v1052 = vunpack.c.l.b16 %v764
    %v1053 = vunpack.c.l.b16 %v765
    %v1054 = vunpack.c.l.b16 %v766
    %v1055 = vunpack.c.l.b16 %v767
    %v1056 = vunpack.c.l.b16 %v768
    %v1057 = vunpack.c.l.b16 %v769
    %v1058 = vunpack.c.l.b16 %v770
    %v1059 = vunpack.c.l.b16 %v771
    %v1060 = vunpack.c.l.b16 %v772
    %v1061 = vunpack.c.l.b16 %v773
    %v1062 = vunpack.c.l.b16 %v774
    %v1063 = vunpack.c.l.b16 %v775
    %v1064 = vunpack.c.l.b16 %v776
    %v1065 = vunpack.c.l.b16 %v777
    %v1066 = vunpack.c.l.b16 %v778
    %v1067 = vunpack.c.l.b16 %v779
    %v1068 = vunpack.c.l.b16 %v780
    %v1069 = vunpack.c.l.b16 %v781
    %v1070 = vunpack.c.l.b16 %v782
    %v1071 = vunpack.c.l.b16 %v783
    %v1072 = vunpack.c.l.b16 %v784
    %v1073 = vunpack.c.l.b16 %v785
    %v1074 = vunpack.c.l.b16 %v786
    %v1075 = vunpack.c.l.b16 %v787
    %v1076 = vunpack.c.l.b16 %v788
    %v1077 = vunpack.c.l.b16 %v789
    %v1078 = vunpack.c.l.b16 %v790
    %v1079 = vunpack.c.l.b16 %v791
    %v1080 = vunpack.c.l.b16 %v792
    %v1081 = vunpack.c.l.b16 %v793
    %v1082 = vunpack.c.l.b16 %v794
    %v1083 = vunpack.c.l.b16 %v795
    %v1084 = vunpack.c.l.b16 %v796
    %v1085 = vunpack.c.l.b16 %v797
    %v1086 = vunpack.c.l.b16 %v798
    %v1087 = vunpack.c.l.b16 %v799
    %v1088 = vunpack.c.l.b16 %v800
    %v1089 = vunpack.c.l.b16 %v801
    %v1090 = vunpack.c.l.b16 %v802
    %v1091 = vunpack.c.l.b16 %v803
    %v1092 = vunpack.c.l.b16 %v804
    %v1093 = vunpack.c.l.b16 %v805
    %v1094 = vunpack.c.l.b16 %v806
    %v1095 = vunpack.c.l.b16 %v807
    %v1096 = vunpack.c.l.b16 %v808
    %v1097 = vunpack.c.l.b16 %v809
    %v1098 = vunpack.c.l.b16 %v810
    %v1099 = vunpack.c.l.b16 %v811
    %v1100 = vunpack.c.l.b16 %v812
    %v1101 = vunpack.c.l.b16 %v813
    %v1102 = vunpack.c.l.b16 %v814
    %v1103 = vunpack.c.l.b16 %v815
    %v1104 = vunpack.c.l.b16 %v816
    %v1105 = vunpack.c.l.b16 %v817
    %v1106 = vunpack.c.l.b16 %v818
    %v1107 = vunpack.c.l.b16 %v819
    %v1108 = vunpack.c.l.b16 %v820
    %v1109 = vunpack.c.l.b16 %v821
    %v1110 = vunpack.c.l.b16 %v822
    %v1111 = vunpack.c.l.b16 %v823
    %v1112 = vunpack.c.l.b16 %v824
    %v1113 = vunpack.c.l.b16 %v825
    %v1114 = vunpack.c.l.b16 %v826
    %v1115 = vunpack.c.l.b16 %v827
    %v1116 = vunpack.c.l.b16 %v828
    %v1117 = vunpack.c.l.b16 %v829
    %v1118 = vunpack.c.l.b16 %v830
    %v1119 = vunpack.c.l.b16 %v831
    %v1120 = vunpack.c.l.b16 %v832
    %v1121 = vunpack.c.l.b16 %v833
    %v1122 = vunpack.c.l.b16 %v834
    %v1123 = vunpack.c.l.b16 %v835
    %v1124 = vunpack.c.l.b16 %v836
    %v1125 = vunpack.c.l.b16 %v837
    %v1126 = vunpack.c.l.b16 %v838
    %v1127 = vunpack.c.l.b16 %v839
    %v1128 = vunpack.c.l.b16 %v840
    %v1129 = vunpack.c.l.b16 %v841
    %v1130 = vunpack.c.l.b16 %v842
    %v1131 = vunpack.c.l.b16 %v843
    %v1132 = vunpack.c.l.b16 %v844
    %v1133 = vunpack.c.l.b16 %v845
    %v1134 = vunpack.c.l.b16 %v846
    %v1135 = vunpack.c.l.b16 %v847
    %v1136 = vunpack.c.l.b16 %v848
    %v1137 = vunpack.c.l.b16 %v849
    %v1138 = vunpack.c.l.b16 %v850
    %v1139 = vunpack.c.l.b16 %v851
    %v1140 = vunpack.c.l.b16 %v852
    %v1141 = vunpack.c.l.b16 %v853
    %v1142 = vunpack.c.l.b16 %v854
    %v1143 = vunpack.c.l.b16 %v855
    %v1144 = vunpack.c.l.b16 %v856
    %v1145 = vunpack.c.l.b16 %v857
    %v1146 = vunpack.c.l.b16 %v858
    %v1147 = vunpack.c.l.b16 %v859
    %v1148 = vunpack.c.l.b16 %v860
    %v1149 = vunpack.c.l.b16 %v861
    %v1150 = vunpack.c.l.b16 %v862
    %v1151 = vunpack.c.l.b16 %v863
    %v1152 = vunpack.c.l.b16 %v864
    %v1153 = vunpack.c.l.b16 %v865
    %v1154 = vunpack.c.l.b16 %v866
    %v1155 = vunpack.c.l.b16 %v867
    %v1156 = vunpack.c.l.b16 %v868
    %v1157 = vunpack.c.l.b16 %v869
    %v1158 = vunpack.c.l.b16 %v870
    %v1159 = vunpack.c.l.b16 %v871
    %v1160 = vunpack.c.l.b16 %v872
    %v1161 = vunpack.c.l.b16 %v873
    %v1162 = vunpack.c.l.b16 %v874
    %v1163 = vunpack.c.l.b16 %v875
    %v1164 = vunpack.c.l.b16 %v876
    %v1165 = vunpack.c.l.b16 %v877
    %v1166 = vunpack.c.l.b16 %v878
    %v1167 = vunpack.c.l.b16 %v879
    %v1168 = vunpack.c.l.b16 %v880
    %v1169 = vunpack.c.l.b16 %v881
    %v1170 = vunpack.c.l.b16 %v882
    %v1171 = vunpack.c.l.b16 %v883
    %v1172 = vunpack.c.l.b16 %v884
    %v1173 = vunpack.c.l.b16 %v885
    %v1174 = vunpack.c.l.b16 %v886
    %v1175 = vunpack.c.l.b16 %v887
    %v1176 = vunpack.c.l.b16 %v888
    %v1177 = vunpack.c.l.b16 %v889
    %v1178 = vunpack.c.l.b16 %v890
    %v1179 = vunpack.c.l.b16 %v891
    %v1180 = vunpack.c.l.b16 %v892
    %v1181 = vunpack.c.l.b16 %v893
    %v1182 = vunpack.c.l.b16 %v894
    %v1183 = vunpack.c.l.b16 %v895
    %v1184 = vunpack.c.l.b16 %v896
    %v1185 = vunpack.c.l.b16 %v897
    %v1186 = vunpack.c.l.b16 %v898
    %v1187 = vunpack.c.l.b16 %v899
    %v1188 = vpack.c.b16 %v1045, %v1044
    %v1189 = vpack.c.b16 %v1047, %v1046
    %v1190 = vpack.c.b16 %v1049, %v1048
    %v1191 = vpack.c.b16 %v1051, %v1050
    %v1192 = vpack.c.b16 %v1053, %v1052
    %v1193 = vpack.c.b16 %v1055, %v1054
    %v1194 = vpack.c.b16 %v1057, %v1056
    %v1195 = vpack.c.b16 %v1059, %v1058
    %v1196 = vpack.c.b16 %v1061, %v1060
    %v1197 = vpack.c.b16 %v1063, %v1062
    %v1198 = vpack.c.b16 %v1065, %v1064
    %v1199 = vpack.c.b16 %v1067, %v1066
    %v1200 = vpack.c.b16 %v1069, %v1068
    %v1201 = vpack.c.b16 %v1071, %v1070
    %v1202 = vpack.c.b16 %v1073, %v1072
    %v1203 = vpack.c.b16 %v1075, %v1074
    %v1204 = vpack.c.b16 %v1077, %v1076
    %v1205 = vpack.c.b16 %v1079, %v1078
    %v1206 = vpack.c.b16 %v1081, %v1080
    %v1207 = vpack.c.b16 %v1083, %v1082
    %v1208 = vpack.c.b16 %v1085, %v1084
    %v1209 = vpack.c.b16 %v1087, %v1086
    %v1210 = vpack.c.b16 %v1089, %v1088
    %v1211 = vpack.c.b16 %v1091, %v1090
    %v1212 = vpack.c.b16 %v1093, %v1092
    %v1213 = vpack.c.b16 %v1095, %v1094
    %v1214 = vpack.c.b16 %v1097, %v1096
    %v1215 = vpack.c.b16 %v1099, %v1098
    %v1216 = vpack.c.b16 %v1101, %v1100
    %v1217 = vpack.c.b16 %v1103, %v1102
    %v1218 = vpack.c.b16 %v1105, %v1104
    %v1219 = vpack.c.b16 %v1107, %v1106
    %v1220 = vpack.c.b16 %v1109, %v1108
    %v1221 = vpack.c.b16 %v1111, %v1110
    %v1222 = vpack.c.b16 %v1113, %v1112
    %v1223 = vpack.c.b16 %v1115, %v1114
    %v1224 = vpack.c.b16 %v1117, %v1116
    %v1225 = vpack.c.b16 %v1119, %v1118
    %v1226 = vpack.c.b16 %v1121, %v1120
    %v1227 = vpack.c.b16 %v1123, %v1122
    %v1228 = vpack.c.b16 %v1125, %v1124
    %v1229 = vpack.c.b16 %v1127, %v1126
    %v1230 = vpack.c.b16 %v1129, %v1128
    %v1231 = vpack.c.b16 %v1131, %v1130
    %v1232 = vpack.c.b16 %v1133, %v1132
    %v1233 = vpack.c.b16 %v1135, %v1134
    %v1234 = vpack.c.b16 %v1137, %v1136
    %v1235 = vpack.c.b16 %v1139, %v1138
    %v1236 = vpack.c.b16 %v1141, %v1140
    %v1237 = vpack.c.b16 %v1143, %v1142
    %v1238 = vpack.c.b16 %v1145, %v1144
    %v1239 = vpack.c.b16 %v1147, %v1146
    %v1240 = vpack.c.b16 %v1149, %v1148
    %v1241 = vpack.c.b16 %v1151, %v1150
    %v1242 = vpack.c.b16 %v1153, %v1152
    %v1243 = vpack.c.b16 %v1155, %v1154
    %v1244 = vpack.c.b16 %v1157, %v1156
    %v1245 = vpack.c.b16 %v1159, %v1158
    %v1246 = vpack.c.b16 %v1161, %v1160
    %v1247 = vpack.c.b16 %v1163, %v1162
    %v1248 = vpack.c.b16 %v1165, %v1164
    %v1249 = vpack.c.b16 %v1167, %v1166
    %v1250 = vpack.c.b16 %v1169, %v1168
    %v1251 = vpack.c.b16 %v1171, %v1170
    %v1252 = vpack.c.b16 %v1173, %v1172
    %v1253 = vpack.c.b16 %v1175, %v1174
    %v1254 = vpack.c.b16 %v1177, %v1176
    %v1255 = vpack.c.b16 %v1179, %v1178
    %v1256 = vpack.c.b16 %v1181, %v1180
    %v1257 = vpack.c.b16 %v1183, %v1182
    %v1258 = vpack.c.b16 %v1185, %v1184
    %v1259 = vpack.c.b16 %v1187, %v1186
    %1332 = vmatprep.subr.bf16.mxu0 0
    %1333 = vmatpush1.bf16.msra.mxu0 %v1195
    %1334 = vmatprep.subr.bf16.mxu0 0
    %1335 = vmatpush1.bf16.msra.mxu0 %v1194
    %1336 = vmatprep.subr.bf16.mxu0 0
    %1337 = vmatpush1.bf16.msra.mxu0 %v1193
    %1338 = vmatprep.subr.bf16.mxu0 0
    %1339 = vmatpush1.bf16.msra.mxu0 %v1192
    %1340 = vmatprep.subr.bf16.mxu0 0
    %1341 = vmatpush1.bf16.msra.mxu0 %v1191
    %1342 = vmatprep.subr.bf16.mxu0 0
    %1343 = vmatpush1.bf16.msra.mxu0 %v1190
    %1344 = vmatprep.subr.bf16.mxu0 0
    %1345 = vmatpush1.bf16.msra.mxu0 %v1189
    %1346 = vmatprep.subr.bf16.mxu0 0
    %1347 = vmatpush1.bf16.msra.mxu0 %v1188
    %1348 = vmatprep.subr.bf16.mxu0 0
    %1349 = vmatpush2.bf16.msra.mxu0 %v1203
    %1350 = vmatprep.subr.bf16.mxu0 0
    %1351 = vmatpush2.bf16.msra.mxu0 %v1202
    %1352 = vmatprep.subr.bf16.mxu0 0
    %1353 = vmatpush2.bf16.msra.mxu0 %v1201
    %1354 = vmatprep.subr.bf16.mxu0 0
    %1355 = vmatpush2.bf16.msra.mxu0 %v1200
    %1356 = vmatprep.subr.bf16.mxu0 0
    %1357 = vmatpush2.bf16.msra.mxu0 %v1199
    %1358 = vmatprep.subr.bf16.mxu0 0
    %1359 = vmatpush2.bf16.msra.mxu0 %v1198
    %1360 = vmatprep.subr.bf16.mxu0 0
    %1361 = vmatpush2.bf16.msra.mxu0 %v1197
    %1362 = vmatprep.subr.bf16.mxu0 0
    %1363 = vmatpush2.bf16.msra.mxu0 %v1196
    %1364 = vmatprep.mubr.bf16.mxu0 %v685
    %1365 = vmatmul.mubr.bf16.gmra.mxu0 %v684
    %v1366 = vpop.f32.mrf.mxu0
    %v1367 = vadd.f32 0.0, %v1366
    %v1368 = vpop.f32.mrf.mxu0
    %v1369 = vpop.f32.mrf.mxu0
    %v1370 = vadd.f32 0.0, %v1369
    %v1371 = vpop.f32.mrf.mxu0
    %1372 = vmatprep.mubr.bf16.mxu0 %v694
    %1373 = vmatmul.mubr.bf16.gmra.mxu0 %v693
    %v1374 = vpop.f32.mrf.mxu0
    %v1375 = vadd.f32 0.0, %v1374
    %v1376 = vpop.f32.mrf.mxu0
    %v1377 = vpop.f32.mrf.mxu0
    %v1378 = vadd.f32 0.0, %v1377
    %v1379 = vpop.f32.mrf.mxu0
    %1380 = vmatprep.mubr.bf16.mxu0 %v703
    %1381 = vmatmul.mubr.bf16.gmra.mxu0 %v702
    %v1382 = vpop.f32.mrf.mxu0
    %v1383 = vadd.f32 0.0, %v1382
    %v1384 = vpop.f32.mrf.mxu0
    %v1385 = vpop.f32.mrf.mxu0
    %v1386 = vadd.f32 0.0, %v1385
    %v1387 = vpop.f32.mrf.mxu0
    %1388 = vmatprep.mubr.bf16.mxu0 %v712
    %1389 = vmatmul.mubr.bf16.gmra.mxu0 %v711
    %v1390 = vpop.f32.mrf.mxu0
    %v1391 = vadd.f32 0.0, %v1390
    %v1392 = vpop.f32.mrf.mxu0
    %v1393 = vpop.f32.mrf.mxu0
    %v1394 = vadd.f32 0.0, %v1393
    %v1395 = vpop.f32.mrf.mxu0
    %1396 = vmatprep.mubr.bf16.mxu0 %v721
    %1397 = vmatmul.mubr.bf16.gmra.mxu0 %v720
    %v1398 = vpop.f32.mrf.mxu0
    %v1399 = vadd.f32 0.0, %v1398
    %v1400 = vpop.f32.mrf.mxu0
    %v1401 = vpop.f32.mrf.mxu0
    %v1402 = vadd.f32 0.0, %v1401
    %v1403 = vpop.f32.mrf.mxu0
    %1404 = vmatprep.mubr.bf16.mxu0 %v730
    %1405 = vmatmul.mubr.bf16.gmra.mxu0 %v729
    %v1406 = vpop.f32.mrf.mxu0
    %v1407 = vadd.f32 0.0, %v1406
    %v1408 = vpop.f32.mrf.mxu0
    %v1409 = vpop.f32.mrf.mxu0
    %v1410 = vadd.f32 0.0, %v1409
    %v1411 = vpop.f32.mrf.mxu0
    %1412 = vmatprep.mubr.bf16.mxu0 %v739
    %1413 = vmatmul.mubr.bf16.gmra.mxu0 %v738
    %v1414 = vpop.f32.mrf.mxu0
    %v1415 = vadd.f32 0.0, %v1414
    %v1416 = vpop.f32.mrf.mxu0
    %v1417 = vpop.f32.mrf.mxu0
    %v1418 = vadd.f32 0.0, %v1417
    %v1419 = vpop.f32.mrf.mxu0
    %1420 = vmatprep.mubr.bf16.mxu0 %v748
    %1421 = vmatmul.mubr.bf16.gmra.mxu0 %v747
    %v1422 = vpop.f32.mrf.mxu0
    %v1423 = vadd.f32 0.0, %v1422
    %v1424 = vpop.f32.mrf.mxu0
    %v1425 = vpop.f32.mrf.mxu0
    %v1426 = vadd.f32 0.0, %v1425
    %v1427 = vpop.f32.mrf.mxu0
    %1428 = vdwg.mxu0
    %1429 = vmatprep.subr.bf16.mxu0 0
    %1430 = vmatpush1.bf16.msra.mxu0 %v1211
    %1431 = vmatprep.subr.bf16.mxu0 0
    %1432 = vmatpush1.bf16.msra.mxu0 %v1210
    %1433 = vmatprep.subr.bf16.mxu0 0
    %1434 = vmatpush1.bf16.msra.mxu0 %v1209
    %1435 = vmatprep.subr.bf16.mxu0 0
    %1436 = vmatpush1.bf16.msra.mxu0 %v1208
    %1437 = vmatprep.subr.bf16.mxu0 0
    %1438 = vmatpush1.bf16.msra.mxu0 %v1207
    %1439 = vmatprep.subr.bf16.mxu0 0
    %1440 = vmatpush1.bf16.msra.mxu0 %v1206
    %1441 = vmatprep.subr.bf16.mxu0 0
    %1442 = vmatpush1.bf16.msra.mxu0 %v1205
    %1443 = vmatprep.subr.bf16.mxu0 0
    %1444 = vmatpush1.bf16.msra.mxu0 %v1204
    %1445 = vmatprep.subr.bf16.mxu0 0
    %1446 = vmatpush2.bf16.msra.mxu0 %v1219
    %1447 = vmatprep.subr.bf16.mxu0 0
    %1448 = vmatpush2.bf16.msra.mxu0 %v1218
    %1449 = vmatprep.subr.bf16.mxu0 0
    %1450 = vmatpush2.bf16.msra.mxu0 %v1217
    %1451 = vmatprep.subr.bf16.mxu0 0
    %1452 = vmatpush2.bf16.msra.mxu0 %v1216
    %1453 = vmatprep.subr.bf16.mxu0 0
    %1454 = vmatpush2.bf16.msra.mxu0 %v1215
    %1455 = vmatprep.subr.bf16.mxu0 0
    %1456 = vmatpush2.bf16.msra.mxu0 %v1214
    %1457 = vmatprep.subr.bf16.mxu0 0
    %1458 = vmatpush2.bf16.msra.mxu0 %v1213
    %1459 = vmatprep.subr.bf16.mxu0 0
    %1460 = vmatpush2.bf16.msra.mxu0 %v1212
    %1461 = vmatprep.mubr.bf16.mxu0 %v687
    %1462 = vmatmul.mubr.bf16.gmra.mxu0 %v686
    %v1463 = vpop.f32.mrf.mxu0
    %v1464 = vadd.f32 %v1367, %v1463
    %v1465 = vpop.f32.mrf.mxu0
    %v1466 = vpop.f32.mrf.mxu0
    %v1467 = vadd.f32 %v1370, %v1466
    %v1468 = vpop.f32.mrf.mxu0
    %1469 = vmatprep.mubr.bf16.mxu0 %v696
    %1470 = vmatmul.mubr.bf16.gmra.mxu0 %v695
    %v1471 = vpop.f32.mrf.mxu0
    %v1472 = vadd.f32 %v1375, %v1471
    %v1473 = vpop.f32.mrf.mxu0
    %v1474 = vpop.f32.mrf.mxu0
    %v1475 = vadd.f32 %v1378, %v1474
    %v1476 = vpop.f32.mrf.mxu0
    %1477 = vmatprep.mubr.bf16.mxu0 %v705
    %1478 = vmatmul.mubr.bf16.gmra.mxu0 %v704
    %v1479 = vpop.f32.mrf.mxu0
    %v1480 = vadd.f32 %v1383, %v1479
    %v1481 = vpop.f32.mrf.mxu0
    %v1482 = vpop.f32.mrf.mxu0
    %v1483 = vadd.f32 %v1386, %v1482
    %v1484 = vpop.f32.mrf.mxu0
    %1485 = vmatprep.mubr.bf16.mxu0 %v714
    %1486 = vmatmul.mubr.bf16.gmra.mxu0 %v713
    %v1487 = vpop.f32.mrf.mxu0
    %v1488 = vadd.f32 %v1391, %v1487
    %v1489 = vpop.f32.mrf.mxu0
    %v1490 = vpop.f32.mrf.mxu0
    %v1491 = vadd.f32 %v1394, %v1490
    %v1492 = vpop.f32.mrf.mxu0
    %1493 = vmatprep.mubr.bf16.mxu0 %v723
    %1494 = vmatmul.mubr.bf16.gmra.mxu0 %v722
    %v1495 = vpop.f32.mrf.mxu0
    %v1496 = vadd.f32 %v1399, %v1495
    %v1497 = vpop.f32.mrf.mxu0
    %v1498 = vpop.f32.mrf.mxu0
    %v1499 = vadd.f32 %v1402, %v1498
    %v1500 = vpop.f32.mrf.mxu0
    %1501 = vmatprep.mubr.bf16.mxu0 %v732
    %1502 = vmatmul.mubr.bf16.gmra.mxu0 %v731
    %v1503 = vpop.f32.mrf.mxu0
    %v1504 = vadd.f32 %v1407, %v1503
    %v1505 = vpop.f32.mrf.mxu0
    %v1506 = vpop.f32.mrf.mxu0
    %v1507 = vadd.f32 %v1410, %v1506
    %v1508 = vpop.f32.mrf.mxu0
    %1509 = vmatprep.mubr.bf16.mxu0 %v741
    %1510 = vmatmul.mubr.bf16.gmra.mxu0 %v740
    %v1511 = vpop.f32.mrf.mxu0
    %v1512 = vadd.f32 %v1415, %v1511
    %v1513 = vpop.f32.mrf.mxu0
    %v1514 = vpop.f32.mrf.mxu0
    %v1515 = vadd.f32 %v1418, %v1514
    %v1516 = vpop.f32.mrf.mxu0
    %1517 = vmatprep.mubr.bf16.mxu0 %v750
    %1518 = vmatmul.mubr.bf16.gmra.mxu0 %v749
    %v1519 = vpop.f32.mrf.mxu0
    %v1520 = vadd.f32 %v1423, %v1519
    %v1521 = vpop.f32.mrf.mxu0
    %v1522 = vpop.f32.mrf.mxu0
    %v1523 = vadd.f32 %v1426, %v1522
    %v1524 = vpop.f32.mrf.mxu0
    %1525 = vdwg.mxu0
    %1526 = vmatprep.subr.bf16.mxu0 0
    %1527 = vmatpush1.bf16.msra.mxu0 %v1227
    %1528 = vmatprep.subr.bf16.mxu0 0
    %1529 = vmatpush1.bf16.msra.mxu0 %v1226
    %1530 = vmatprep.subr.bf16.mxu0 0
    %1531 = vmatpush1.bf16.msra.mxu0 %v1225
    %1532 = vmatprep.subr.bf16.mxu0 0
    %1533 = vmatpush1.bf16.msra.mxu0 %v1224
    %1534 = vmatprep.subr.bf16.mxu0 0
    %1535 = vmatpush1.bf16.msra.mxu0 %v1223
    %1536 = vmatprep.subr.bf16.mxu0 0
    %1537 = vmatpush1.bf16.msra.mxu0 %v1222
    %1538 = vmatprep.subr.bf16.mxu0 0
    %1539 = vmatpush1.bf16.msra.mxu0 %v1221
    %1540 = vmatprep.subr.bf16.mxu0 0
    %1541 = vmatpush1.bf16.msra.mxu0 %v1220
    %1542 = vmatprep.subr.bf16.mxu0 0
    %1543 = vmatpush2.bf16.msra.mxu0 %v1235
    %1544 = vmatprep.subr.bf16.mxu0 0
    %1545 = vmatpush2.bf16.msra.mxu0 %v1234
    %1546 = vmatprep.subr.bf16.mxu0 0
    %1547 = vmatpush2.bf16.msra.mxu0 %v1233
    %1548 = vmatprep.subr.bf16.mxu0 0
    %1549 = vmatpush2.bf16.msra.mxu0 %v1232
    %1550 = vmatprep.subr.bf16.mxu0 0
    %1551 = vmatpush2.bf16.msra.mxu0 %v1231
    %1552 = vmatprep.subr.bf16.mxu0 0
    %1553 = vmatpush2.bf16.msra.mxu0 %v1230
    %1554 = vmatprep.subr.bf16.mxu0 0
    %1555 = vmatpush2.bf16.msra.mxu0 %v1229
    %1556 = vmatprep.subr.bf16.mxu0 0
    %1557 = vmatpush2.bf16.msra.mxu0 %v1228
    %1558 = vmatprep.mubr.bf16.mxu0 %v689
    %1559 = vmatmul.mubr.bf16.gmra.mxu0 %v688
    %v1560 = vpop.f32.mrf.mxu0
    %v1561 = vadd.f32 %v1464, %v1560
    %v1562 = vpop.f32.mrf.mxu0
    %v1563 = vpop.f32.mrf.mxu0
    %v1564 = vadd.f32 %v1467, %v1563
    %v1565 = vpop.f32.mrf.mxu0
    %1566 = vmatprep.mubr.bf16.mxu0 %v698
    %1567 = vmatmul.mubr.bf16.gmra.mxu0 %v697
    %v1568 = vpop.f32.mrf.mxu0
    %v1569 = vadd.f32 %v1472, %v1568
    %v1570 = vpop.f32.mrf.mxu0
    %v1571 = vpop.f32.mrf.mxu0
    %v1572 = vadd.f32 %v1475, %v1571
    %v1573 = vpop.f32.mrf.mxu0
    %1574 = vmatprep.mubr.bf16.mxu0 %v707
    %1575 = vmatmul.mubr.bf16.gmra.mxu0 %v706
    %v1576 = vpop.f32.mrf.mxu0
    %v1577 = vadd.f32 %v1480, %v1576
    %v1578 = vpop.f32.mrf.mxu0
    %v1579 = vpop.f32.mrf.mxu0
    %v1580 = vadd.f32 %v1483, %v1579
    %v1581 = vpop.f32.mrf.mxu0
    %1582 = vmatprep.mubr.bf16.mxu0 %v716
    %1583 = vmatmul.mubr.bf16.gmra.mxu0 %v715
    %v1584 = vpop.f32.mrf.mxu0
    %v1585 = vadd.f32 %v1488, %v1584
    %v1586 = vpop.f32.mrf.mxu0
    %v1587 = vpop.f32.mrf.mxu0
    %v1588 = vadd.f32 %v1491, %v1587
    %v1589 = vpop.f32.mrf.mxu0
    %1590 = vmatprep.mubr.bf16.mxu0 %v725
    %1591 = vmatmul.mubr.bf16.gmra.mxu0 %v724
    %v1592 = vpop.f32.mrf.mxu0
    %v1593 = vadd.f32 %v1496, %v1592
    %v1594 = vpop.f32.mrf.mxu0
    %v1595 = vpop.f32.mrf.mxu0
    %v1596 = vadd.f32 %v1499, %v1595
    %v1597 = vpop.f32.mrf.mxu0
    %1598 = vmatprep.mubr.bf16.mxu0 %v734
    %1599 = vmatmul.mubr.bf16.gmra.mxu0 %v733
    %v1600 = vpop.f32.mrf.mxu0
    %v1601 = vadd.f32 %v1504, %v1600
    %v1602 = vpop.f32.mrf.mxu0
    %v1603 = vpop.f32.mrf.mxu0
    %v1604 = vadd.f32 %v1507, %v1603
    %v1605 = vpop.f32.mrf.mxu0
    %1606 = vmatprep.mubr.bf16.mxu0 %v743
    %1607 = vmatmul.mubr.bf16.gmra.mxu0 %v742
    %v1608 = vpop.f32.mrf.mxu0
    %v1609 = vadd.f32 %v1512, %v1608
    %v1610 = vpop.f32.mrf.mxu0
    %v1611 = vpop.f32.mrf.mxu0
    %v1612 = vadd.f32 %v1515, %v1611
    %v1613 = vpop.f32.mrf.mxu0
    %1614 = vmatprep.mubr.bf16.mxu0 %v752
    %1615 = vmatmul.mubr.bf16.gmra.mxu0 %v751
    %v1616 = vpop.f32.mrf.mxu0
    %v1617 = vadd.f32 %v1520, %v1616
    %v1618 = vpop.f32.mrf.mxu0
    %v1619 = vpop.f32.mrf.mxu0
    %v1620 = vadd.f32 %v1523, %v1619
    %v1621 = vpop.f32.mrf.mxu0
    %1622 = vdwg.mxu0
    %1623 = vmatprep.subr.bf16.mxu0 0
    %1624 = vmatpush1.bf16.msra.mxu0 %v1243
    %1625 = vmatprep.subr.bf16.mxu0 0
    %1626 = vmatpush1.bf16.msra.mxu0 %v1242
    %1627 = vmatprep.subr.bf16.mxu0 0
    %1628 = vmatpush1.bf16.msra.mxu0 %v1241
    %1629 = vmatprep.subr.bf16.mxu0 0
    %1630 = vmatpush1.bf16.msra.mxu0 %v1240
    %1631 = vmatprep.subr.bf16.mxu0 0
    %1632 = vmatpush1.bf16.msra.mxu0 %v1239
    %1633 = vmatprep.subr.bf16.mxu0 0
    %1634 = vmatpush1.bf16.msra.mxu0 %v1238
    %1635 = vmatprep.subr.bf16.mxu0 0
    %1636 = vmatpush1.bf16.msra.mxu0 %v1237
    %1637 = vmatprep.subr.bf16.mxu0 0
    %1638 = vmatpush1.bf16.msra.mxu0 %v1236
    %1639 = vmatprep.subr.bf16.mxu0 0
    %1640 = vmatpush2.bf16.msra.mxu0 %v1251
    %1641 = vmatprep.subr.bf16.mxu0 0
    %1642 = vmatpush2.bf16.msra.mxu0 %v1250
    %1643 = vmatprep.subr.bf16.mxu0 0
    %1644 = vmatpush2.bf16.msra.mxu0 %v1249
    %1645 = vmatprep.subr.bf16.mxu0 0
    %1646 = vmatpush2.bf16.msra.mxu0 %v1248
    %1647 = vmatprep.subr.bf16.mxu0 0
    %1648 = vmatpush2.bf16.msra.mxu0 %v1247
    %1649 = vmatprep.subr.bf16.mxu0 0
    %1650 = vmatpush2.bf16.msra.mxu0 %v1246
    %1651 = vmatprep.subr.bf16.mxu0 0
    %1652 = vmatpush2.bf16.msra.mxu0 %v1245
    %1653 = vmatprep.subr.bf16.mxu0 0
    %1654 = vmatpush2.bf16.msra.mxu0 %v1244
    %1655 = vmatprep.mubr.bf16.mxu0 %v691
    %1656 = vmatmul.mubr.bf16.gmra.mxu0 %v690
    %v1657 = vpop.f32.mrf.mxu0
    %v1658 = vadd.f32 %v1561, %v1657
    %v1659 = vpop.f32.mrf.mxu0
    %v1660 = vpop.f32.mrf.mxu0
    %v1661 = vadd.f32 %v1564, %v1660
    %v1662 = vpop.f32.mrf.mxu0
    %1663 = vmatprep.mubr.bf16.mxu0 %v700
    %1664 = vmatmul.mubr.bf16.gmra.mxu0 %v699
    %v1665 = vpop.f32.mrf.mxu0
    %v1666 = vadd.f32 %v1569, %v1665
    %v1667 = vpop.f32.mrf.mxu0
    %v1668 = vpop.f32.mrf.mxu0
    %v1669 = vadd.f32 %v1572, %v1668
    %v1670 = vpop.f32.mrf.mxu0
    %1671 = vmatprep.mubr.bf16.mxu0 %v709
    %1672 = vmatmul.mubr.bf16.gmra.mxu0 %v708
    %v1673 = vpop.f32.mrf.mxu0
    %v1674 = vadd.f32 %v1577, %v1673
    %v1675 = vpop.f32.mrf.mxu0
    %v1676 = vpop.f32.mrf.mxu0
    %v1677 = vadd.f32 %v1580, %v1676
    %v1678 = vpop.f32.mrf.mxu0
    %1679 = vmatprep.mubr.bf16.mxu0 %v718
    %1680 = vmatmul.mubr.bf16.gmra.mxu0 %v717
    %v1681 = vpop.f32.mrf.mxu0
    %v1682 = vadd.f32 %v1585, %v1681
    %v1683 = vpop.f32.mrf.mxu0
    %v1684 = vpop.f32.mrf.mxu0
    %v1685 = vadd.f32 %v1588, %v1684
    %v1686 = vpop.f32.mrf.mxu0
    %1687 = vmatprep.mubr.bf16.mxu0 %v727
    %1688 = vmatmul.mubr.bf16.gmra.mxu0 %v726
    %v1689 = vpop.f32.mrf.mxu0
    %v1690 = vadd.f32 %v1593, %v1689
    %v1691 = vpop.f32.mrf.mxu0
    %v1692 = vpop.f32.mrf.mxu0
    %v1693 = vadd.f32 %v1596, %v1692
    %v1694 = vpop.f32.mrf.mxu0
    %1695 = vmatprep.mubr.bf16.mxu0 %v736
    %1696 = vmatmul.mubr.bf16.gmra.mxu0 %v735
    %v1697 = vpop.f32.mrf.mxu0
    %v1698 = vadd.f32 %v1601, %v1697
    %v1699 = vpop.f32.mrf.mxu0
    %v1700 = vpop.f32.mrf.mxu0
    %v1701 = vadd.f32 %v1604, %v1700
    %v1702 = vpop.f32.mrf.mxu0
    %1703 = vmatprep.mubr.bf16.mxu0 %v745
    %1704 = vmatmul.mubr.bf16.gmra.mxu0 %v744
    %v1705 = vpop.f32.mrf.mxu0
    %v1706 = vadd.f32 %v1609, %v1705
    %v1707 = vpop.f32.mrf.mxu0
    %v1708 = vpop.f32.mrf.mxu0
    %v1709 = vadd.f32 %v1612, %v1708
    %v1710 = vpop.f32.mrf.mxu0
    %1711 = vmatprep.mubr.bf16.mxu0 %v754
    %1712 = vmatmul.mubr.bf16.gmra.mxu0 %v753
    %v1713 = vpop.f32.mrf.mxu0
    %v1714 = vadd.f32 %v1617, %v1713
    %v1715 = vpop.f32.mrf.mxu0
    %v1716 = vpop.f32.mrf.mxu0
    %v1717 = vadd.f32 %v1620, %v1716
    %v1718 = vpop.f32.mrf.mxu0
    %1719 = vdwg.mxu0
    %1720 = vmatprep.subr.bf16.mxu0 0
    %1721 = vmatpush1.bf16.msra.mxu0 %v1259
    %1722 = vmatprep.subr.bf16.mxu0 0
    %1723 = vmatpush1.bf16.msra.mxu0 %v1258
    %1724 = vmatprep.subr.bf16.mxu0 0
    %1725 = vmatpush1.bf16.msra.mxu0 %v1257
    %1726 = vmatprep.subr.bf16.mxu0 0
    %1727 = vmatpush1.bf16.msra.mxu0 %v1256
    %1728 = vmatprep.subr.bf16.mxu0 0
    %1729 = vmatpush1.bf16.msra.mxu0 %v1255
    %1730 = vmatprep.subr.bf16.mxu0 0
    %1731 = vmatpush1.bf16.msra.mxu0 %v1254
    %1732 = vmatprep.subr.bf16.mxu0 0
    %1733 = vmatpush1.bf16.msra.mxu0 %v1253
    %1734 = vmatprep.subr.bf16.mxu0 0
    %1735 = vmatpush1.bf16.msra.mxu0 %v1252
    %1736 = vmatprep.subr.bf16.mxu0 0
    %1737 = vmatpush2.bf16.msra.mxu0 0
    %1738 = vmatprep.subr.bf16.mxu0 0
    %1739 = vmatpush2.bf16.msra.mxu0 0
    %1740 = vmatprep.subr.bf16.mxu0 0
    %1741 = vmatpush2.bf16.msra.mxu0 0
    %1742 = vmatprep.subr.bf16.mxu0 0
    %1743 = vmatpush2.bf16.msra.mxu0 0
    %1744 = vmatprep.subr.bf16.mxu0 0
    %1745 = vmatpush2.bf16.msra.mxu0 0
    %1746 = vmatprep.subr.bf16.mxu0 0
    %1747 = vmatpush2.bf16.msra.mxu0 0
    %1748 = vmatprep.subr.bf16.mxu0 0
    %1749 = vmatpush2.bf16.msra.mxu0 0
    %1750 = vmatprep.subr.bf16.mxu0 0
    %1751 = vmatpush2.bf16.msra.mxu0 0
    %1752 = vmatprep.mubr.bf16.mxu0 0
    %1753 = vmatmul.mubr.bf16.gmra.mxu0 %v692
    %v1754 = vpop.f32.mrf.mxu0
    %v1755 = vadd.f32 %v1658, %v1754
    %v1756 = vpop.f32.mrf.mxu0
    %v1757 = vpop.f32.mrf.mxu0
    %v1758 = vadd.f32 %v1661, %v1757
    %v1759 = vpop.f32.mrf.mxu0
    %1760 = vmatprep.mubr.bf16.mxu0 0
    %1761 = vmatmul.mubr.bf16.gmra.mxu0 %v701
    %v1762 = vpop.f32.mrf.mxu0
    %v1763 = vadd.f32 %v1666, %v1762
    %v1764 = vpop.f32.mrf.mxu0
    %v1765 = vpop.f32.mrf.mxu0
    %v1766 = vadd.f32 %v1669, %v1765
    %v1767 = vpop.f32.mrf.mxu0
    %1768 = vmatprep.mubr.bf16.mxu0 0
    %1769 = vmatmul.mubr.bf16.gmra.mxu0 %v710
    %v1770 = vpop.f32.mrf.mxu0
    %v1771 = vadd.f32 %v1674, %v1770
    %v1772 = vpop.f32.mrf.mxu0
    %v1773 = vpop.f32.mrf.mxu0
    %v1774 = vadd.f32 %v1677, %v1773
    %v1775 = vpop.f32.mrf.mxu0
    %1776 = vmatprep.mubr.bf16.mxu0 0
    %1777 = vmatmul.mubr.bf16.gmra.mxu0 %v719
    %v1778 = vpop.f32.mrf.mxu0
    %v1779 = vadd.f32 %v1682, %v1778
    %v1780 = vpop.f32.mrf.mxu0
    %v1781 = vpop.f32.mrf.mxu0
    %v1782 = vadd.f32 %v1685, %v1781
    %v1783 = vpop.f32.mrf.mxu0
    %1784 = vmatprep.mubr.bf16.mxu0 0
    %1785 = vmatmul.mubr.bf16.gmra.mxu0 %v728
    %v1786 = vpop.f32.mrf.mxu0
    %v1787 = vadd.f32 %v1690, %v1786
    %v1788 = vpop.f32.mrf.mxu0
    %v1789 = vpop.f32.mrf.mxu0
    %v1790 = vadd.f32 %v1693, %v1789
    %v1791 = vpop.f32.mrf.mxu0
    %1792 = vmatprep.mubr.bf16.mxu0 0
    %1793 = vmatmul.mubr.bf16.gmra.mxu0 %v737
    %v1794 = vpop.f32.mrf.mxu0
    %v1795 = vadd.f32 %v1698, %v1794
    %v1796 = vpop.f32.mrf.mxu0
    %v1797 = vpop.f32.mrf.mxu0
    %v1798 = vadd.f32 %v1701, %v1797
    %v1799 = vpop.f32.mrf.mxu0
    %1800 = vmatprep.mubr.bf16.mxu0 0
    %1801 = vmatmul.mubr.bf16.gmra.mxu0 %v746
    %v1802 = vpop.f32.mrf.mxu0
    %v1803 = vadd.f32 %v1706, %v1802
    %v1804 = vpop.f32.mrf.mxu0
    %v1805 = vpop.f32.mrf.mxu0
    %v1806 = vadd.f32 %v1709, %v1805
    %v1807 = vpop.f32.mrf.mxu0
    %1808 = vmatprep.mubr.bf16.mxu0 0
    %1809 = vmatmul.mubr.bf16.gmra.mxu0 %v755
    %v1810 = vpop.f32.mrf.mxu0
    %v1811 = vadd.f32 %v1714, %v1810
    %v1812 = vpop.f32.mrf.mxu0
    %v1813 = vpop.f32.mrf.mxu0
    %v1814 = vadd.f32 %v1717, %v1813
    %v1815 = vpop.f32.mrf.mxu0
    %1816 = vdwg.mxu0
    %v1817 = vld [vmem:[%s5] sm:$0x1]
    %v1818 = vld [vmem:[%s6] sm:$0x1]
    %v1819 = vadd.f32 %v1755, %v1758
    %v1820 = vadd.f32 %v1819, %v1763
    %v1821 = vadd.f32 %v1820, %v1766
    %v1822 = vadd.f32 %v1821, %v1771
    %v1823 = vadd.f32 %v1822, %v1774
    %v1824 = vadd.f32 %v1823, %v1779
    %v1825 = vadd.f32 %v1824, %v1782
    %v1826 = vadd.f32 %v1825, %v1787
    %v1827 = vadd.f32 %v1826, %v1790
    %v1828 = vadd.f32 %v1827, %v1795
    %v1829 = vadd.f32 %v1828, %v1798
    %v1830 = vadd.f32 %v1829, %v1803
    %v1831 = vadd.f32 %v1830, %v1806
    %v1832 = vadd.f32 %v1831, %v1811
    %v1833 = vadd.f32 %v1832, %v1814
    %v1834 = vrot.slane %v1833, 4
    %v1835 = vadd.f32 %v1833, %v1834
    %v1836 = vrot.slane %v1835, 2
    %v1837 = vadd.f32 %v1835, %v1836
    %v1838 = vrot.slane %v1837, 1
    %v1839 = vadd.f32 %v1837, %v1838
    %v1840 = vmul.f32 %v1839, %v362
    %v1841 = vsub.f32 %v1755, %v1840
    %v1842 = vsub.f32 %v1758, %v1840
    %v1843 = vsub.f32 %v1763, %v1840
    %v1844 = vsub.f32 %v1766, %v1840
    %v1845 = vsub.f32 %v1771, %v1840
    %v1846 = vsub.f32 %v1774, %v1840
    %v1847 = vsub.f32 %v1779, %v1840
    %v1848 = vsub.f32 %v1782, %v1840
    %v1849 = vsub.f32 %v1787, %v1840
    %v1850 = vsub.f32 %v1790, %v1840
    %v1851 = vsub.f32 %v1795, %v1840
    %v1852 = vsub.f32 %v1798, %v1840
    %v1853 = vsub.f32 %v1803, %v1840
    %v1854 = vsub.f32 %v1806, %v1840
    %v1855 = vsub.f32 %v1811, %v1840
    %v1856 = vsub.f32 %v1814, %v1840
    %v1857 = vmul.f32 %v1841, %v1841
    %v1858 = vmul.f32 %v1842, %v1842
    %v1859 = vmul.f32 %v1843, %v1843
    %v1860 = vmul.f32 %v1844, %v1844
    %v1861 = vmul.f32 %v1845, %v1845
    %v1862 = vmul.f32 %v1846, %v1846
    %v1863 = vmul.f32 %v1847, %v1847
    %v1864 = vmul.f32 %v1848, %v1848
    %v1865 = vmul.f32 %v1849, %v1849
    %v1866 = vmul.f32 %v1850, %v1850
    %v1867 = vmul.f32 %v1851, %v1851
    %v1868 = vmul.f32 %v1852, %v1852
    %v1869 = vmul.f32 %v1853, %v1853
    %v1870 = vmul.f32 %v1854, %v1854
    %v1871 = vmul.f32 %v1855, %v1855
    %v1872 = vmul.f32 %v1856, %v1856
    %v1873 = vadd.f32 %v1857, %v1858
    %v1874 = vadd.f32 %v1873, %v1859
    %v1875 = vadd.f32 %v1874, %v1860
    %v1876 = vadd.f32 %v1875, %v1861
    %v1877 = vadd.f32 %v1876, %v1862
    %v1878 = vadd.f32 %v1877, %v1863
    %v1879 = vadd.f32 %v1878, %v1864
    %v1880 = vadd.f32 %v1879, %v1865
    %v1881 = vadd.f32 %v1880, %v1866
    %v1882 = vadd.f32 %v1881, %v1867
    %v1883 = vadd.f32 %v1882, %v1868
    %v1884 = vadd.f32 %v1883, %v1869
    %v1885 = vadd.f32 %v1884, %v1870
    %v1886 = vadd.f32 %v1885, %v1871
    %v1887 = vadd.f32 %v1886, %v1872
    %v1888 = vrot.slane %v1887, 4
    %v1889 = vadd.f32 %v1887, %v1888
    %v1890 = vrot.slane %v1889, 2
    %v1891 = vadd.f32 %v1889, %v1890
    %v1892 = vrot.slane %v1891, 1
    %v1893 = vadd.f32 %v1891, %v1892
    %v1894 = vmul.f32 %v1893, %v362
    %v1895 = vadd.f32 %v1894, 1e-05
    %v1896 = vrsqrt.pop %v1895
    %v1897 = vmul.f32 %v1817, %v1896
    %v1899 = vlaneseq
    %v1900 = vshrl.u32 %v1899, 7
    %v1901 = vsub.s32 0, %v1900
    %v1902 = vrot.slane %v1897, %v1901
    %v1904 = vmul.f32 %v1841, %v1902
    %v1905 = vmul.f32 %v1842, %v1902
    %v1906 = vmul.f32 %v1843, %v1902
    %v1907 = vmul.f32 %v1844, %v1902
    %v1908 = vmul.f32 %v1845, %v1902
    %v1909 = vmul.f32 %v1846, %v1902
    %v1910 = vmul.f32 %v1847, %v1902
    %v1911 = vmul.f32 %v1848, %v1902
    %v1912 = vmul.f32 %v1849, %v1902
    %v1913 = vmul.f32 %v1850, %v1902
    %v1914 = vmul.f32 %v1851, %v1902
    %v1915 = vmul.f32 %v1852, %v1902
    %v1916 = vmul.f32 %v1853, %v1902
    %v1917 = vmul.f32 %v1854, %v1902
    %v1918 = vmul.f32 %v1855, %v1902
    %v1919 = vmul.f32 %v1856, %v1902
    %v1921 = vlaneseq
    %v1922 = vshrl.u32 %v1921, 7
    %v1923 = vsub.s32 0, %v1922
    %v1924 = vrot.slane %v1818, %v1923
    %v1926 = vadd.f32 %v1904, %v1924
    %v1927 = vadd.f32 %v1905, %v1924
    %v1928 = vadd.f32 %v1906, %v1924
    %v1929 = vadd.f32 %v1907, %v1924
    %v1930 = vadd.f32 %v1908, %v1924
    %v1931 = vadd.f32 %v1909, %v1924
    %v1932 = vadd.f32 %v1910, %v1924
    %v1933 = vadd.f32 %v1911, %v1924
    %v1934 = vadd.f32 %v1912, %v1924
    %v1935 = vadd.f32 %v1913, %v1924
    %v1936 = vadd.f32 %v1914, %v1924
    %v1937 = vadd.f32 %v1915, %v1924
    %v1938 = vadd.f32 %v1916, %v1924
    %v1939 = vadd.f32 %v1917, %v1924
    %v1940 = vadd.f32 %v1918, %v1924
    %v1941 = vadd.f32 %v1919, %v1924
    %v1942 = vmax.f32 %v1926, 0.0
    %v1943 = vmax.f32 %v1927, 0.0
    %v1944 = vmax.f32 %v1928, 0.0
    %v1945 = vmax.f32 %v1929, 0.0
    %v1946 = vmax.f32 %v1930, 0.0
    %v1947 = vmax.f32 %v1931, 0.0
    %v1948 = vmax.f32 %v1932, 0.0
    %v1949 = vmax.f32 %v1933, 0.0
    %v1950 = vmax.f32 %v1934, 0.0
    %v1951 = vmax.f32 %v1935, 0.0
    %v1952 = vmax.f32 %v1936, 0.0
    %v1953 = vmax.f32 %v1937, 0.0
    %v1954 = vmax.f32 %v1938, 0.0
    %v1955 = vmax.f32 %v1939, 0.0
    %v1956 = vmax.f32 %v1940, 0.0
    %v1957 = vmax.f32 %v1941, 0.0
    %v1958 = vpack.c.bf16 %v1943, %v1942
    %v1959 = vpack.c.bf16 %v1945, %v1944
    %v1960 = vpack.c.bf16 %v1947, %v1946
    %v1961 = vpack.c.bf16 %v1949, %v1948
    %v1962 = vpack.c.bf16 %v1951, %v1950
    %v1963 = vpack.c.bf16 %v1953, %v1952
    %v1964 = vpack.c.bf16 %v1955, %v1954
    %v1965 = vpack.c.bf16 %v1957, %v1956
    %v1966 = vld [vmem:[#allocation9] sm:$0xf]
    %v1967 = vld [vmem:[#allocation9 + $0x4] sm:$0xf]
    %v1968 = vld [vmem:[#allocation9 + $0x8] sm:$0xf]
    %v1969 = vld [vmem:[#allocation9 + $0xc] sm:$0xf]
    %v1970 = vld [vmem:[#allocation9 + $0x10] sm:$0xf]
    %v1971 = vld [vmem:[#allocation9 + $0x14] sm:$0xf]
    %v1972 = vld [vmem:[#allocation9 + $0x18] sm:$0xf]
    %v1973 = vld [vmem:[#allocation9 + $0x1c] sm:$0xf]
    %v1974 = vld [vmem:[#allocation9 + $0x20] sm:$0xf]
    %v1975 = vld [vmem:[#allocation9 + $0x24] sm:$0xf]
    %v1976 = vld [vmem:[#allocation9 + $0x28] sm:$0xf]
    %v1977 = vld [vmem:[#allocation9 + $0x2c] sm:$0xf]
    %v1978 = vld [vmem:[#allocation9 + $0x30] sm:$0xf]
    %v1979 = vld [vmem:[#allocation9 + $0x34] sm:$0xf]
    %v1980 = vld [vmem:[#allocation9 + $0x38] sm:$0xf]
    %v1981 = vld [vmem:[#allocation9 + $0x3c] sm:$0xf]
    %v1998 = vunpack.c.l.b16 %v1966
    %v1999 = vunpack.c.l.b16 %v1967
    %v2000 = vunpack.c.l.b16 %v1968
    %v2001 = vunpack.c.l.b16 %v1969
    %v2002 = vunpack.c.l.b16 %v1970
    %v2003 = vunpack.c.l.b16 %v1971
    %v2004 = vunpack.c.l.b16 %v1972
    %v2005 = vunpack.c.l.b16 %v1973
    %v2006 = vunpack.c.l.b16 %v1974
    %v2007 = vunpack.c.l.b16 %v1975
    %v2008 = vunpack.c.l.b16 %v1976
    %v2009 = vunpack.c.l.b16 %v1977
    %v2010 = vunpack.c.l.b16 %v1978
    %v2011 = vunpack.c.l.b16 %v1979
    %v2012 = vunpack.c.l.b16 %v1980
    %v2013 = vunpack.c.l.b16 %v1981
    %v2014 = vpack.c.b16 %v1999, %v1998
    %v2015 = vpack.c.b16 %v2001, %v2000
    %v2016 = vpack.c.b16 %v2003, %v2002
    %v2017 = vpack.c.b16 %v2005, %v2004
    %v2018 = vpack.c.b16 %v2007, %v2006
    %v2019 = vpack.c.b16 %v2009, %v2008
    %v2020 = vpack.c.b16 %v2011, %v2010
    %v2021 = vpack.c.b16 %v2013, %v2012
    %2030 = vmatprep.subr.bf16.mxu0 0
    %2031 = vmatpush1.bf16.msra.mxu0 %v2021
    %2032 = vmatprep.subr.bf16.mxu0 0
    %2033 = vmatpush1.bf16.msra.mxu0 %v2020
    %2034 = vmatprep.subr.bf16.mxu0 0
    %2035 = vmatpush1.bf16.msra.mxu0 %v2019
    %2036 = vmatprep.subr.bf16.mxu0 0
    %2037 = vmatpush1.bf16.msra.mxu0 %v2018
    %2038 = vmatprep.subr.bf16.mxu0 0
    %2039 = vmatpush1.bf16.msra.mxu0 %v2017
    %2040 = vmatprep.subr.bf16.mxu0 0
    %2041 = vmatpush1.bf16.msra.mxu0 %v2016
    %2042 = vmatprep.subr.bf16.mxu0 0
    %2043 = vmatpush1.bf16.msra.mxu0 %v2015
    %2044 = vmatprep.subr.bf16.mxu0 0
    %2045 = vmatpush1.bf16.msra.mxu0 %v2014
    %2046 = vmatprep.subr.bf16.mxu0 0
    %2047 = vmatpush2.bf16.msra.mxu0 0
    %2048 = vmatprep.subr.bf16.mxu0 0
    %2049 = vmatpush2.bf16.msra.mxu0 0
    %2050 = vmatprep.subr.bf16.mxu0 0
    %2051 = vmatpush2.bf16.msra.mxu0 0
    %2052 = vmatprep.subr.bf16.mxu0 0
    %2053 = vmatpush2.bf16.msra.mxu0 0
    %2054 = vmatprep.subr.bf16.mxu0 0
    %2055 = vmatpush2.bf16.msra.mxu0 0
    %2056 = vmatprep.subr.bf16.mxu0 0
    %2057 = vmatpush2.bf16.msra.mxu0 0
    %2058 = vmatprep.subr.bf16.mxu0 0
    %2059 = vmatpush2.bf16.msra.mxu0 0
    %2060 = vmatprep.subr.bf16.mxu0 0
    %2061 = vmatpush2.bf16.msra.mxu0 0
    %2062 = vmatprep.mubr.bf16.mxu0 0
    %2063 = vmatmul.mubr.bf16.gmra.mxu0 %v1958
    %v2064 = vpop.f32.mrf.mxu0
    %v2065 = vadd.f32 0.0, %v2064
    %v2066 = vpop.f32.mrf.mxu0
    %v2067 = vpop.f32.mrf.mxu0
    %v2068 = vadd.f32 0.0, %v2067
    %v2069 = vpop.f32.mrf.mxu0
    %2070 = vmatprep.mubr.bf16.mxu0 0
    %2071 = vmatmul.mubr.bf16.gmra.mxu0 %v1959
    %v2072 = vpop.f32.mrf.mxu0
    %v2073 = vadd.f32 0.0, %v2072
    %v2074 = vpop.f32.mrf.mxu0
    %v2075 = vpop.f32.mrf.mxu0
    %v2076 = vadd.f32 0.0, %v2075
    %v2077 = vpop.f32.mrf.mxu0
    %2078 = vmatprep.mubr.bf16.mxu0 0
    %2079 = vmatmul.mubr.bf16.gmra.mxu0 %v1960
    %v2080 = vpop.f32.mrf.mxu0
    %v2081 = vadd.f32 0.0, %v2080
    %v2082 = vpop.f32.mrf.mxu0
    %v2083 = vpop.f32.mrf.mxu0
    %v2084 = vadd.f32 0.0, %v2083
    %v2085 = vpop.f32.mrf.mxu0
    %2086 = vmatprep.mubr.bf16.mxu0 0
    %2087 = vmatmul.mubr.bf16.gmra.mxu0 %v1961
    %v2088 = vpop.f32.mrf.mxu0
    %v2089 = vadd.f32 0.0, %v2088
    %v2090 = vpop.f32.mrf.mxu0
    %v2091 = vpop.f32.mrf.mxu0
    %v2092 = vadd.f32 0.0, %v2091
    %v2093 = vpop.f32.mrf.mxu0
    %2094 = vmatprep.mubr.bf16.mxu0 0
    %2095 = vmatmul.mubr.bf16.gmra.mxu0 %v1962
    %v2096 = vpop.f32.mrf.mxu0
    %v2097 = vadd.f32 0.0, %v2096
    %v2098 = vpop.f32.mrf.mxu0
    %v2099 = vpop.f32.mrf.mxu0
    %v2100 = vadd.f32 0.0, %v2099
    %v2101 = vpop.f32.mrf.mxu0
    %2102 = vmatprep.mubr.bf16.mxu0 0
    %2103 = vmatmul.mubr.bf16.gmra.mxu0 %v1963
    %v2104 = vpop.f32.mrf.mxu0
    %v2105 = vadd.f32 0.0, %v2104
    %v2106 = vpop.f32.mrf.mxu0
    %v2107 = vpop.f32.mrf.mxu0
    %v2108 = vadd.f32 0.0, %v2107
    %v2109 = vpop.f32.mrf.mxu0
    %2110 = vmatprep.mubr.bf16.mxu0 0
    %2111 = vmatmul.mubr.bf16.gmra.mxu0 %v1964
    %v2112 = vpop.f32.mrf.mxu0
    %v2113 = vadd.f32 0.0, %v2112
    %v2114 = vpop.f32.mrf.mxu0
    %v2115 = vpop.f32.mrf.mxu0
    %v2116 = vadd.f32 0.0, %v2115
    %v2117 = vpop.f32.mrf.mxu0
    %2118 = vmatprep.mubr.bf16.mxu0 0
    %2119 = vmatmul.mubr.bf16.gmra.mxu0 %v1965
    %v2120 = vpop.f32.mrf.mxu0
    %v2121 = vadd.f32 0.0, %v2120
    %v2122 = vpop.f32.mrf.mxu0
    %v2123 = vpop.f32.mrf.mxu0
    %v2124 = vadd.f32 0.0, %v2123
    %v2125 = vpop.f32.mrf.mxu0
    %2126 = vdwg.mxu0
    %v2127 = vld [vmem:[%s8] sm:$0x1]
    %v2128 = vld [vmem:[%s9] sm:$0x1]
    %v2129 = vadd.f32 %v2065, %v2068
    %v2130 = vadd.f32 %v2129, %v2073
    %v2131 = vadd.f32 %v2130, %v2076
    %v2132 = vadd.f32 %v2131, %v2081
    %v2133 = vadd.f32 %v2132, %v2084
    %v2134 = vadd.f32 %v2133, %v2089
    %v2135 = vadd.f32 %v2134, %v2092
    %v2136 = vadd.f32 %v2135, %v2097
    %v2137 = vadd.f32 %v2136, %v2100
    %v2138 = vadd.f32 %v2137, %v2105
    %v2139 = vadd.f32 %v2138, %v2108
    %v2140 = vadd.f32 %v2139, %v2113
    %v2141 = vadd.f32 %v2140, %v2116
    %v2142 = vadd.f32 %v2141, %v2121
    %v2143 = vadd.f32 %v2142, %v2124
    %v2144 = vrot.slane %v2143, 4
    %v2145 = vadd.f32 %v2143, %v2144
    %v2146 = vrot.slane %v2145, 2
    %v2147 = vadd.f32 %v2145, %v2146
    %v2148 = vrot.slane %v2147, 1
    %v2149 = vadd.f32 %v2147, %v2148
    %v2150 = vmul.f32 %v2149, %v362
    %v2151 = vsub.f32 %v2065, %v2150
    %v2152 = vsub.f32 %v2068, %v2150
    %v2153 = vsub.f32 %v2073, %v2150
    %v2154 = vsub.f32 %v2076, %v2150
    %v2155 = vsub.f32 %v2081, %v2150
    %v2156 = vsub.f32 %v2084, %v2150
    %v2157 = vsub.f32 %v2089, %v2150
    %v2158 = vsub.f32 %v2092, %v2150
    %v2159 = vsub.f32 %v2097, %v2150
    %v2160 = vsub.f32 %v2100, %v2150
    %v2161 = vsub.f32 %v2105, %v2150
    %v2162 = vsub.f32 %v2108, %v2150
    %v2163 = vsub.f32 %v2113, %v2150
    %v2164 = vsub.f32 %v2116, %v2150
    %v2165 = vsub.f32 %v2121, %v2150
    %v2166 = vsub.f32 %v2124, %v2150
    %v2167 = vmul.f32 %v2151, %v2151
    %v2168 = vmul.f32 %v2152, %v2152
    %v2169 = vmul.f32 %v2153, %v2153
    %v2170 = vmul.f32 %v2154, %v2154
    %v2171 = vmul.f32 %v2155, %v2155
    %v2172 = vmul.f32 %v2156, %v2156
    %v2173 = vmul.f32 %v2157, %v2157
    %v2174 = vmul.f32 %v2158, %v2158
    %v2175 = vmul.f32 %v2159, %v2159
    %v2176 = vmul.f32 %v2160, %v2160
    %v2177 = vmul.f32 %v2161, %v2161
    %v2178 = vmul.f32 %v2162, %v2162
    %v2179 = vmul.f32 %v2163, %v2163
    %v2180 = vmul.f32 %v2164, %v2164
    %v2181 = vmul.f32 %v2165, %v2165
    %v2182 = vmul.f32 %v2166, %v2166
    %v2183 = vadd.f32 %v2167, %v2168
    %v2184 = vadd.f32 %v2183, %v2169
    %v2185 = vadd.f32 %v2184, %v2170
    %v2186 = vadd.f32 %v2185, %v2171
    %v2187 = vadd.f32 %v2186, %v2172
    %v2188 = vadd.f32 %v2187, %v2173
    %v2189 = vadd.f32 %v2188, %v2174
    %v2190 = vadd.f32 %v2189, %v2175
    %v2191 = vadd.f32 %v2190, %v2176
    %v2192 = vadd.f32 %v2191, %v2177
    %v2193 = vadd.f32 %v2192, %v2178
    %v2194 = vadd.f32 %v2193, %v2179
    %v2195 = vadd.f32 %v2194, %v2180
    %v2196 = vadd.f32 %v2195, %v2181
    %v2197 = vadd.f32 %v2196, %v2182
    %v2198 = vrot.slane %v2197, 4
    %v2199 = vadd.f32 %v2197, %v2198
    %v2200 = vrot.slane %v2199, 2
    %v2201 = vadd.f32 %v2199, %v2200
    %v2202 = vrot.slane %v2201, 1
    %v2203 = vadd.f32 %v2201, %v2202
    %v2204 = vmul.f32 %v2203, %v362
    %v2205 = vadd.f32 %v2204, 1e-05
    %v2206 = vrsqrt.pop %v2205
    %v2207 = vmul.f32 %v2127, %v2206
    %v2209 = vlaneseq
    %v2210 = vshrl.u32 %v2209, 7
    %v2211 = vsub.s32 0, %v2210
    %v2212 = vrot.slane %v2207, %v2211
    %v2214 = vmul.f32 %v2151, %v2212
    %v2215 = vmul.f32 %v2152, %v2212
    %v2216 = vmul.f32 %v2153, %v2212
    %v2217 = vmul.f32 %v2154, %v2212
    %v2218 = vmul.f32 %v2155, %v2212
    %v2219 = vmul.f32 %v2156, %v2212
    %v2220 = vmul.f32 %v2157, %v2212
    %v2221 = vmul.f32 %v2158, %v2212
    %v2222 = vmul.f32 %v2159, %v2212
    %v2223 = vmul.f32 %v2160, %v2212
    %v2224 = vmul.f32 %v2161, %v2212
    %v2225 = vmul.f32 %v2162, %v2212
    %v2226 = vmul.f32 %v2163, %v2212
    %v2227 = vmul.f32 %v2164, %v2212
    %v2228 = vmul.f32 %v2165, %v2212
    %v2229 = vmul.f32 %v2166, %v2212
    %v2231 = vlaneseq
    %v2232 = vshrl.u32 %v2231, 7
    %v2233 = vsub.s32 0, %v2232
    %v2234 = vrot.slane %v2128, %v2233
    %v2236 = vadd.f32 %v2214, %v2234
    %v2237 = vadd.f32 %v2215, %v2234
    %v2238 = vadd.f32 %v2216, %v2234
    %v2239 = vadd.f32 %v2217, %v2234
    %v2240 = vadd.f32 %v2218, %v2234
    %v2241 = vadd.f32 %v2219, %v2234
    %v2242 = vadd.f32 %v2220, %v2234
    %v2243 = vadd.f32 %v2221, %v2234
    %v2244 = vadd.f32 %v2222, %v2234
    %v2245 = vadd.f32 %v2223, %v2234
    %v2246 = vadd.f32 %v2224, %v2234
    %v2247 = vadd.f32 %v2225, %v2234
    %v2248 = vadd.f32 %v2226, %v2234
    %v2249 = vadd.f32 %v2227, %v2234
    %v2250 = vadd.f32 %v2228, %v2234
    %v2251 = vadd.f32 %v2229, %v2234
    %v2252 = vld [vmem:[#allocation11] sm:$0xf]
    %v2253 = vld [vmem:[#allocation11 + $0x4] sm:$0xf]
    %v2254 = vld [vmem:[#allocation11 + $0x8] sm:$0xf]
    %v2255 = vld [vmem:[#allocation11 + $0xc] sm:$0xf]
    %v2256 = vld [vmem:[#allocation11 + $0x10] sm:$0xf]
    %v2257 = vld [vmem:[#allocation11 + $0x14] sm:$0xf]
    %v2258 = vld [vmem:[#allocation11 + $0x18] sm:$0xf]
    %v2259 = vld [vmem:[#allocation11 + $0x1c] sm:$0xf]
    %v2260 = vld [vmem:[#allocation11 + $0x20] sm:$0xf]
    %v2261 = vld [vmem:[#allocation11 + $0x24] sm:$0xf]
    %v2262 = vld [vmem:[#allocation11 + $0x28] sm:$0xf]
    %v2263 = vld [vmem:[#allocation11 + $0x2c] sm:$0xf]
    %v2264 = vld [vmem:[#allocation11 + $0x30] sm:$0xf]
    %v2265 = vld [vmem:[#allocation11 + $0x34] sm:$0xf]
    %v2266 = vld [vmem:[#allocation11 + $0x38] sm:$0xf]
    %v2267 = vld [vmem:[#allocation11 + $0x3c] sm:$0xf]
    %v2284 = vunpack.c.l.b16 %v2252
    %v2285 = vunpack.c.l.b16 %v2253
    %v2286 = vunpack.c.l.b16 %v2254
    %v2287 = vunpack.c.l.b16 %v2255
    %v2288 = vunpack.c.l.b16 %v2256
    %v2289 = vunpack.c.l.b16 %v2257
    %v2290 = vunpack.c.l.b16 %v2258
    %v2291 = vunpack.c.l.b16 %v2259
    %v2292 = vunpack.c.l.b16 %v2260
    %v2293 = vunpack.c.l.b16 %v2261
    %v2294 = vunpack.c.l.b16 %v2262
    %v2295 = vunpack.c.l.b16 %v2263
    %v2296 = vunpack.c.l.b16 %v2264
    %v2297 = vunpack.c.l.b16 %v2265
    %v2298 = vunpack.c.l.b16 %v2266
    %v2299 = vunpack.c.l.b16 %v2267
    %v2300 = vpack.c.b16 %v2285, %v2284
    %v2301 = vpack.c.b16 %v2287, %v2286
    %v2302 = vpack.c.b16 %v2289, %v2288
    %v2303 = vpack.c.b16 %v2291, %v2290
    %v2304 = vpack.c.b16 %v2293, %v2292
    %v2305 = vpack.c.b16 %v2295, %v2294
    %v2306 = vpack.c.b16 %v2297, %v2296
    %v2307 = vpack.c.b16 %v2299, %v2298
    %2316 = vmatprep.subr.bf16.mxu0 0
    %2317 = vmatpush1.bf16.msra.mxu0 %v2307
    %2318 = vmatprep.subr.bf16.mxu0 0
    %2319 = vmatpush1.bf16.msra.mxu0 %v2306
    %2320 = vmatprep.subr.bf16.mxu0 0
    %2321 = vmatpush1.bf16.msra.mxu0 %v2305
    %2322 = vmatprep.subr.bf16.mxu0 0
    %2323 = vmatpush1.bf16.msra.mxu0 %v2304
    %2324 = vmatprep.subr.bf16.mxu0 0
    %2325 = vmatpush1.bf16.msra.mxu0 %v2303
    %2326 = vmatprep.subr.bf16.mxu0 0
    %2327 = vmatpush1.bf16.msra.mxu0 %v2302
    %2328 = vmatprep.subr.bf16.mxu0 0
    %2329 = vmatpush1.bf16.msra.mxu0 %v2301
    %2330 = vmatprep.subr.bf16.mxu0 0
    %2331 = vmatpush1.bf16.msra.mxu0 %v2300
    %2332 = vmatprep.subr.bf16.mxu0 0
    %2333 = vmatpush2.bf16.msra.mxu0 0
    %2334 = vmatprep.subr.bf16.mxu0 0
    %2335 = vmatpush2.bf16.msra.mxu0 0
    %2336 = vmatprep.subr.bf16.mxu0 0
    %2337 = vmatpush2.bf16.msra.mxu0 0
    %2338 = vmatprep.subr.bf16.mxu0 0
    %2339 = vmatpush2.bf16.msra.mxu0 0
    %2340 = vmatprep.subr.bf16.mxu0 0
    %2341 = vmatpush2.bf16.msra.mxu0 0
    %2342 = vmatprep.subr.bf16.mxu0 0
    %2343 = vmatpush2.bf16.msra.mxu0 0
    %2344 = vmatprep.subr.bf16.mxu0 0
    %2345 = vmatpush2.bf16.msra.mxu0 0
    %2346 = vmatprep.subr.bf16.mxu0 0
    %2347 = vmatpush2.bf16.msra.mxu0 0
    %2348 = vmatprep.mubr.bf16.mxu0 0
    %2349 = vmatmul.mubr.bf16.gmra.mxu0 %v178
    %v2350 = vpop.f32.mrf.mxu0
    %v2351 = vadd.f32 0.0, %v2350
    %v2352 = vpop.f32.mrf.mxu0
    %v2353 = vpop.f32.mrf.mxu0
    %v2354 = vadd.f32 0.0, %v2353
    %v2355 = vpop.f32.mrf.mxu0
    %2356 = vmatprep.mubr.bf16.mxu0 0
    %2357 = vmatmul.mubr.bf16.gmra.mxu0 %v179
    %v2358 = vpop.f32.mrf.mxu0
    %v2359 = vadd.f32 0.0, %v2358
    %v2360 = vpop.f32.mrf.mxu0
    %v2361 = vpop.f32.mrf.mxu0
    %v2362 = vadd.f32 0.0, %v2361
    %v2363 = vpop.f32.mrf.mxu0
    %2364 = vmatprep.mubr.bf16.mxu0 0
    %2365 = vmatmul.mubr.bf16.gmra.mxu0 %v180
    %v2366 = vpop.f32.mrf.mxu0
    %v2367 = vadd.f32 0.0, %v2366
    %v2368 = vpop.f32.mrf.mxu0
    %v2369 = vpop.f32.mrf.mxu0
    %v2370 = vadd.f32 0.0, %v2369
    %v2371 = vpop.f32.mrf.mxu0
    %2372 = vmatprep.mubr.bf16.mxu0 0
    %2373 = vmatmul.mubr.bf16.gmra.mxu0 %v181
    %v2374 = vpop.f32.mrf.mxu0
    %v2375 = vadd.f32 0.0, %v2374
    %v2376 = vpop.f32.mrf.mxu0
    %v2377 = vpop.f32.mrf.mxu0
    %v2378 = vadd.f32 0.0, %v2377
    %v2379 = vpop.f32.mrf.mxu0
    %2380 = vmatprep.mubr.bf16.mxu0 0
    %2381 = vmatmul.mubr.bf16.gmra.mxu0 %v182
    %v2382 = vpop.f32.mrf.mxu0
    %v2383 = vadd.f32 0.0, %v2382
    %v2384 = vpop.f32.mrf.mxu0
    %v2385 = vpop.f32.mrf.mxu0
    %v2386 = vadd.f32 0.0, %v2385
    %v2387 = vpop.f32.mrf.mxu0
    %2388 = vmatprep.mubr.bf16.mxu0 0
    %2389 = vmatmul.mubr.bf16.gmra.mxu0 %v183
    %v2390 = vpop.f32.mrf.mxu0
    %v2391 = vadd.f32 0.0, %v2390
    %v2392 = vpop.f32.mrf.mxu0
    %v2393 = vpop.f32.mrf.mxu0
    %v2394 = vadd.f32 0.0, %v2393
    %v2395 = vpop.f32.mrf.mxu0
    %2396 = vmatprep.mubr.bf16.mxu0 0
    %2397 = vmatmul.mubr.bf16.gmra.mxu0 %v184
    %v2398 = vpop.f32.mrf.mxu0
    %v2399 = vadd.f32 0.0, %v2398
    %v2400 = vpop.f32.mrf.mxu0
    %v2401 = vpop.f32.mrf.mxu0
    %v2402 = vadd.f32 0.0, %v2401
    %v2403 = vpop.f32.mrf.mxu0
    %2404 = vmatprep.mubr.bf16.mxu0 0
    %2405 = vmatmul.mubr.bf16.gmra.mxu0 %v185
    %v2406 = vpop.f32.mrf.mxu0
    %v2407 = vadd.f32 0.0, %v2406
    %v2408 = vpop.f32.mrf.mxu0
    %v2409 = vpop.f32.mrf.mxu0
    %v2410 = vadd.f32 0.0, %v2409
    %v2411 = vpop.f32.mrf.mxu0
    %2412 = vdwg.mxu0
    %v2413 = vld [vmem:[%s11] sm:$0x1]
    %v2414 = vld [vmem:[%s12] sm:$0x1]
    %v2415 = vadd.f32 %v2351, %v2354
    %v2416 = vadd.f32 %v2415, %v2359
    %v2417 = vadd.f32 %v2416, %v2362
    %v2418 = vadd.f32 %v2417, %v2367
    %v2419 = vadd.f32 %v2418, %v2370
    %v2420 = vadd.f32 %v2419, %v2375
    %v2421 = vadd.f32 %v2420, %v2378
    %v2422 = vadd.f32 %v2421, %v2383
    %v2423 = vadd.f32 %v2422, %v2386
    %v2424 = vadd.f32 %v2423, %v2391
    %v2425 = vadd.f32 %v2424, %v2394
    %v2426 = vadd.f32 %v2425, %v2399
    %v2427 = vadd.f32 %v2426, %v2402
    %v2428 = vadd.f32 %v2427, %v2407
    %v2429 = vadd.f32 %v2428, %v2410
    %v2430 = vrot.slane %v2429, 4
    %v2431 = vadd.f32 %v2429, %v2430
    %v2432 = vrot.slane %v2431, 2
    %v2433 = vadd.f32 %v2431, %v2432
    %v2434 = vrot.slane %v2433, 1
    %v2435 = vadd.f32 %v2433, %v2434
    %v2436 = vmul.f32 %v2435, %v362
    %v2437 = vsub.f32 %v2351, %v2436
    %v2438 = vsub.f32 %v2354, %v2436
    %v2439 = vsub.f32 %v2359, %v2436
    %v2440 = vsub.f32 %v2362, %v2436
    %v2441 = vsub.f32 %v2367, %v2436
    %v2442 = vsub.f32 %v2370, %v2436
    %v2443 = vsub.f32 %v2375, %v2436
    %v2444 = vsub.f32 %v2378, %v2436
    %v2445 = vsub.f32 %v2383, %v2436
    %v2446 = vsub.f32 %v2386, %v2436
    %v2447 = vsub.f32 %v2391, %v2436
    %v2448 = vsub.f32 %v2394, %v2436
    %v2449 = vsub.f32 %v2399, %v2436
    %v2450 = vsub.f32 %v2402, %v2436
    %v2451 = vsub.f32 %v2407, %v2436
    %v2452 = vsub.f32 %v2410, %v2436
    %v2453 = vmul.f32 %v2437, %v2437
    %v2454 = vmul.f32 %v2438, %v2438
    %v2455 = vmul.f32 %v2439, %v2439
    %v2456 = vmul.f32 %v2440, %v2440
    %v2457 = vmul.f32 %v2441, %v2441
    %v2458 = vmul.f32 %v2442, %v2442
    %v2459 = vmul.f32 %v2443, %v2443
    %v2460 = vmul.f32 %v2444, %v2444
    %v2461 = vmul.f32 %v2445, %v2445
    %v2462 = vmul.f32 %v2446, %v2446
    %v2463 = vmul.f32 %v2447, %v2447
    %v2464 = vmul.f32 %v2448, %v2448
    %v2465 = vmul.f32 %v2449, %v2449
    %v2466 = vmul.f32 %v2450, %v2450
    %v2467 = vmul.f32 %v2451, %v2451
    %v2468 = vmul.f32 %v2452, %v2452
    %v2469 = vadd.f32 %v2453, %v2454
    %v2470 = vadd.f32 %v2469, %v2455
    %v2471 = vadd.f32 %v2470, %v2456
    %v2472 = vadd.f32 %v2471, %v2457
    %v2473 = vadd.f32 %v2472, %v2458
    %v2474 = vadd.f32 %v2473, %v2459
    %v2475 = vadd.f32 %v2474, %v2460
    %v2476 = vadd.f32 %v2475, %v2461
    %v2477 = vadd.f32 %v2476, %v2462
    %v2478 = vadd.f32 %v2477, %v2463
    %v2479 = vadd.f32 %v2478, %v2464
    %v2480 = vadd.f32 %v2479, %v2465
    %v2481 = vadd.f32 %v2480, %v2466
    %v2482 = vadd.f32 %v2481, %v2467
    %v2483 = vadd.f32 %v2482, %v2468
    %v2484 = vrot.slane %v2483, 4
    %v2485 = vadd.f32 %v2483, %v2484
    %v2486 = vrot.slane %v2485, 2
    %v2487 = vadd.f32 %v2485, %v2486
    %v2488 = vrot.slane %v2487, 1
    %v2489 = vadd.f32 %v2487, %v2488
    %v2490 = vmul.f32 %v2489, %v362
    %v2491 = vadd.f32 %v2490, 1e-05
    %v2492 = vrsqrt.pop %v2491
    %v2493 = vmul.f32 %v2413, %v2492
    %v2495 = vlaneseq
    %v2496 = vshrl.u32 %v2495, 7
    %v2497 = vsub.s32 0, %v2496
    %v2498 = vrot.slane %v2493, %v2497
    %v2500 = vmul.f32 %v2437, %v2498
    %v2501 = vmul.f32 %v2438, %v2498
    %v2502 = vmul.f32 %v2439, %v2498
    %v2503 = vmul.f32 %v2440, %v2498
    %v2504 = vmul.f32 %v2441, %v2498
    %v2505 = vmul.f32 %v2442, %v2498
    %v2506 = vmul.f32 %v2443, %v2498
    %v2507 = vmul.f32 %v2444, %v2498
    %v2508 = vmul.f32 %v2445, %v2498
    %v2509 = vmul.f32 %v2446, %v2498
    %v2510 = vmul.f32 %v2447, %v2498
    %v2511 = vmul.f32 %v2448, %v2498
    %v2512 = vmul.f32 %v2449, %v2498
    %v2513 = vmul.f32 %v2450, %v2498
    %v2514 = vmul.f32 %v2451, %v2498
    %v2515 = vmul.f32 %v2452, %v2498
    %v2517 = vlaneseq
    %v2518 = vshrl.u32 %v2517, 7
    %v2519 = vsub.s32 0, %v2518
    %v2520 = vrot.slane %v2414, %v2519
    %v2522 = vadd.f32 %v2500, %v2520
    %v2523 = vadd.f32 %v2501, %v2520
    %v2524 = vadd.f32 %v2502, %v2520
    %v2525 = vadd.f32 %v2503, %v2520
    %v2526 = vadd.f32 %v2504, %v2520
    %v2527 = vadd.f32 %v2505, %v2520
    %v2528 = vadd.f32 %v2506, %v2520
    %v2529 = vadd.f32 %v2507, %v2520
    %v2530 = vadd.f32 %v2508, %v2520
    %v2531 = vadd.f32 %v2509, %v2520
    %v2532 = vadd.f32 %v2510, %v2520
    %v2533 = vadd.f32 %v2511, %v2520
    %v2534 = vadd.f32 %v2512, %v2520
    %v2535 = vadd.f32 %v2513, %v2520
    %v2536 = vadd.f32 %v2514, %v2520
    %v2537 = vadd.f32 %v2515, %v2520
    %v2538 = vadd.f32 %v2236, %v2522
    %v2539 = vadd.f32 %v2237, %v2523
    %v2540 = vadd.f32 %v2238, %v2524
    %v2541 = vadd.f32 %v2239, %v2525
    %v2542 = vadd.f32 %v2240, %v2526
    %v2543 = vadd.f32 %v2241, %v2527
    %v2544 = vadd.f32 %v2242, %v2528
    %v2545 = vadd.f32 %v2243, %v2529
    %v2546 = vadd.f32 %v2244, %v2530
    %v2547 = vadd.f32 %v2245, %v2531
    %v2548 = vadd.f32 %v2246, %v2532
    %v2549 = vadd.f32 %v2247, %v2533
    %v2550 = vadd.f32 %v2248, %v2534
    %v2551 = vadd.f32 %v2249, %v2535
    %v2552 = vadd.f32 %v2250, %v2536
    %v2553 = vadd.f32 %v2251, %v2537
    %v2554 = vmax.f32 %v2538, 0.0
    %v2555 = vmax.f32 %v2539, 0.0
    %v2556 = vmax.f32 %v2540, 0.0
    %v2557 = vmax.f32 %v2541, 0.0
    %v2558 = vmax.f32 %v2542, 0.0
    %v2559 = vmax.f32 %v2543, 0.0
    %v2560 = vmax.f32 %v2544, 0.0
    %v2561 = vmax.f32 %v2545, 0.0
    %v2562 = vmax.f32 %v2546, 0.0
    %v2563 = vmax.f32 %v2547, 0.0
    %v2564 = vmax.f32 %v2548, 0.0
    %v2565 = vmax.f32 %v2549, 0.0
    %v2566 = vmax.f32 %v2550, 0.0
    %v2567 = vmax.f32 %v2551, 0.0
    %v2568 = vmax.f32 %v2552, 0.0
    %v2569 = vmax.f32 %v2553, 0.0
    %2570 = vst [vmem:[#allocation12] sm:$0xff] %v2554
    %2571 = vst [vmem:[#allocation12 + $0x8] sm:$0xff] %v2555
    %2572 = vst [vmem:[#allocation12 + $0x10] sm:$0xff] %v2556
    %2573 = vst [vmem:[#allocation12 + $0x18] sm:$0xff] %v2557
    %2574 = vst [vmem:[#allocation12 + $0x20] sm:$0xff] %v2558
    %2575 = vst [vmem:[#allocation12 + $0x28] sm:$0xff] %v2559
    %2576 = vst [vmem:[#allocation12 + $0x30] sm:$0xff] %v2560
    %2577 = vst [vmem:[#allocation12 + $0x38] sm:$0xff] %v2561
    %2578 = vst [vmem:[#allocation12 + $0x40] sm:$0xff] %v2562
    %2579 = vst [vmem:[#allocation12 + $0x48] sm:$0xff] %v2563
    %2580 = vst [vmem:[#allocation12 + $0x50] sm:$0xff] %v2564
    %2581 = vst [vmem:[#allocation12 + $0x58] sm:$0xff] %v2565
    %2582 = vst [vmem:[#allocation12 + $0x60] sm:$0xff] %v2566
    %2583 = vst [vmem:[#allocation12 + $0x68] sm:$0xff] %v2567
    %2584 = vst [vmem:[#allocation12 + $0x70] sm:$0xff] %v2568
    %2585 = vst [vmem:[#allocation12 + $0x78] sm:$0xff] %v2569
    // Predicated region
    $region74: #{tpu_custom_call.1} parent=1 // pred_check
      _
    $region75: #{tpu_custom_call.1} parent=1 // pred_check_branch
      %2587 = sbr.rel (0) target = $region77
    $region76: #{tpu_custom_call.1} parent=1 // pred_region
      %s2589 = ssub.s32 2048, 2048
      %2590 = vsyncadd [#allocation5], %s2589
      %s2591 = sshll.u32 [#allocation12], 4
      %s2592 = int_to_ptr.vmem [resolvable:$true] %s2591
      %2597 = dma.vmem_to_hbm [thread:$0]  %s2592, 2048, %s13, [#allocation5], 128, 128, 8
    $region77: #{tpu_custom_call.1} parent=1 // pred_fallthru
      _
    // Predicated region
    $region78: #{tpu_custom_call.1} parent=1 // pred_check
      _
    $region79: #{tpu_custom_call.1} parent=1 // pred_check_branch
      %2599 = sbr.rel (0) target = $region81
    $region80: #{tpu_custom_call.1} parent=1 // pred_region
      %2600 = dma.done [#allocation5], 2048
    $region81: #{tpu_custom_call.1} parent=1 // pred_fallthru
      _
    %2601 = vsyncpa [#allocation4], 1
    %2602 = vsyncpa [#allocation7], 1
    %2603 = vsyncpa [#allocation10], 1
    %2604 = vsyncpa [#allocation5], 1

</llo_original>
